<compile_context>
chip_gen: v7x
topology: tpu7x:2x2x1
jax: 0.10.0
libtpu: 0.0.40
codegen_flags: <defaults>
</compile_context>

<pallas_src>
import jax
import jax.numpy as jnp
import numpy as np
from jax import lax
from jax.experimental import pallas as pl
from jax.experimental.pallas import tpu as pltpu

KSIZE = 7
PAD = (KSIZE - 1) // 2  # 3
K2 = KSIZE * KSIZE


def _round_up(x, m):
    return ((x + m - 1) // m) * m


def _make_spatial_gate_kernel(b_tile, C, W, HWp, c_chunk, halo):
    inv_C = 1.0 / float(C)
    n_full = C // c_chunk
    rem = C - n_full * c_chunk
    lp = halo + HWp + halo

    def kernel(x_ref, w_ref, bn_ref, o_ref, pmaps_ref):
        # x_ref / o_ref : (b_tile, C, HWp) VMEM, lane-dense minor axis (HWp % 128 == 0)
        # w_ref         : (2*49,) f32 SMEM -- flattened conv weight [max-ch taps | mean-ch taps]
        # bn_ref        : (2,)    f32 SMEM -- folded eval-mode BatchNorm [scale, shift]
        # pmaps_ref     : (2, halo + HWp + halo) f32 VMEM -- zero-padded flat pooled maps

        bn_scale = bn_ref[0]
        bn_shift = bn_ref[1]

        # ---- hoisted vreg constants (loop invariants across batch elements) ----
        col = lax.broadcasted_iota(jnp.int32, (1, HWp), 1) % W
        col_mask = {}
        for kj in range(KSIZE):
            dj = kj - PAD
            if dj < 0:
                col_mask[kj] = col >= -dj
            elif dj > 0:
                col_mask[kj] = col < (W - dj)
        row_is_max = lax.broadcasted_iota(jnp.int32, (2, HWp), 0) == 0

        # Zero the padded scratch once per grid step; only the halo must stay zero, the interior
        # is fully rewritten for every batch element. Aligned, unmasked store (lp % 128 == 0).
        pmaps_ref[...] = jnp.zeros((2, lp), jnp.float32)

        def body(b, carry):
            # ---- ChannelPool: streamed max / sum, single cross-sublane reduce at the end ----
            run_max = x_ref[b, 0:c_chunk, :].astype(jnp.float32)          # (c_chunk, HWp)
            run_sum = run_max
            for ci in range(1, n_full):
                xc = x_ref[b, ci * c_chunk:(ci + 1) * c_chunk, :].astype(jnp.float32)
                run_max = jnp.maximum(run_max, xc)
                run_sum = run_sum + xc
            pmax = jnp.max(run_max, axis=0, keepdims=True)                # (1, HWp)
            psum = jnp.sum(run_sum, axis=0, keepdims=True)
            if rem:
                xt = x_ref[b, n_full * c_chunk:C, :].astype(jnp.float32)
                pmax = jnp.maximum(pmax, jnp.max(xt, axis=0, keepdims=True))
                psum = psum + jnp.sum(xt, axis=0, keepdims=True)
            pmean = psum * inv_C

            # Aligned interior stores (halo % 128 == 0). Padded lanes (>= H*W) hold pooled
            # zeros and act as the below-image zero halo for the conv.
            pmaps_ref[0:1, halo:halo + HWp] = pmax
            pmaps_ref[1:2, halo:halo + HWp] = pmean

            # ---- 7x7 cross-correlation (2 -> 1 ch, padding=3) on the flat padded rows ----
            # out[p] = sum_{ch,ki,kj} w[ch,ki,kj] * pooled[ch, p + (ki-3)*W + (kj-3)].
            # Both channels are read per tap with one joint (2, HWp) slice; row overflow lands
            # in the zero halo / zero padded lanes; column wrap is removed by the per-kj mask
            # (valid because the mask depends on kj only).
            acc = jnp.zeros((2, HWp), jnp.float32)
            for kj in range(KSIZE):
                dj = kj - PAD
                t = jnp.zeros((2, HWp), jnp.float32)
                for ki in range(KSIZE):
                    s = halo + (ki - PAD) * W + dj
                    win = pmaps_ref[:, s:s + HWp]                         # (2, HWp) joint read
                    w_tap = jnp.where(row_is_max,
                                      w_ref[ki * KSIZE + kj],
                                      w_ref[K2 + ki * KSIZE + kj])
                    t = t + w_tap * win
                if kj in col_mask:
                    t = jnp.where(col_mask[kj], t, 0.0)
                acc = acc + t
            conv = jnp.sum(acc, axis=0, keepdims=True)                    # (1, HWp)

            # ---- folded eval-mode BatchNorm + sigmoid gate ----
            # TODO(synk): train-mode BatchNorm (batch statistics) is not implemented; the
            #             running-stats eval form is folded into (scale, shift).
            gate = jax.nn.sigmoid(conv * bn_scale + bn_shift)             # (1, HWp) f32
            gate_io = gate.astype(o_ref.dtype)

            # ---- apply gate natively in the I/O dtype, lane-dense streamed stores ----
            for cs in range(0, C, c_chunk):
                ce = min(C, cs + c_chunk)
                o_ref[b, cs:ce, :] = x_ref[b, cs:ce, :] * gate_io
            return carry

        if b_tile == 1:
            body(0, 0)
        else:
            lax.fori_loop(0, b_tile, body, 0, unroll=min(2, b_tile))

    return kernel


def _tensorcores_per_chip():
    # Best-effort query; only feeds a tiling heuristic (correctness never depends on it).
    try:
        info = pltpu.get_tpu_info()
        for name in ("num_cores", "num_tensorcores", "tensorcores_per_chip",
                     "cores_per_chip", "num_cores_per_chip"):
            v = getattr(info, name, None)
            if isinstance(v, int) and v > 0:
                return v
    except Exception:
        pass
    try:
        kind = jax.devices()[0].device_kind.lower()
        if ("v5 lite" in kind) or ("v5e" in kind) or ("v5litepod" in kind) or ("v6" in kind):
            return 1
    except Exception:
        pass
    return 2


def _vmem_capacity_bytes():
    try:
        return int(pltpu.get_tpu_info().vmem_capacity_bytes)
    except Exception:
        return 64 << 20


def spatial_gate(x, conv_w, bn_gamma, bn_beta, bn_mean, bn_var, eps=1e-5):
    N, C, H, W = x.shape
    HW = H * W
    HWp = _round_up(HW, 128)            # lane-dense minor axis (unmasked vld/vst)

    # Fold eval-mode BatchNorm into a single (scale, shift) pair (out_channels == 1).
    inv_std = 1.0 / jnp.sqrt(bn_var + eps)
    bn_scale = (bn_gamma * inv_std)[0]
    bn_shift = (bn_beta - bn_mean * bn_gamma * inv_std)[0]
    bn_params = jnp.stack([bn_scale, bn_shift]).astype(jnp.float32)      # (2,)
    w_flat = conv_w.reshape(-1).astype(jnp.float32)                      # (2*7*7,)

    x_flat = x.reshape(N, C, HW)
    if HWp != HW:
        x_flat = jnp.pad(x_flat, ((0, 0), (0, 0), (0, HWp - HW)))

    # ---- batch tile: ~8 MiB blocks, divide N, keep >=2 grid steps only on multi-TC chips ----
    itemsize = jnp.dtype(x.dtype).itemsize
    per_batch = C * HWp * itemsize
    cap = max(1, min(64, (8 << 20) // max(per_batch, 1)))
    if _tensorcores_per_chip() >= 2 and N >= 2:
        cap = max(1, min(cap, N // 2))          # leave work for every TensorCore
    b_tile = 1
    for d in range(1, N + 1):
        if N % d == 0 and d <= cap:
            b_tile = d
    grid = (N // b_tile,)

    c_chunk = min(C, 32)
    halo = _round_up(PAD * W + PAD, 128)        # lane-aligned zero halo on each side
    kernel = _make_spatial_gate_kernel(b_tile, C, W, HWp, c_chunk, halo)

    block_bytes = b_tile * C * HWp * itemsize
    scratch_bytes = 2 * (halo + HWp + halo) * 4
    need = 4 * block_bytes + scratch_bytes + (4 << 20)   # dbl-buffered in + out + scratch + slack
    vmem_limit = int(min(max(16 << 20, need), _vmem_capacity_bytes() * 3 // 4))

    grid_spec = pltpu.PrefetchScalarGridSpec(
        num_scalar_prefetch=0,
        grid=grid,
        in_specs=[
            pl.BlockSpec((b_tile, C, HWp), lambda n: (n, 0, 0)),
            pl.BlockSpec(memory_space=pltpu.MemorySpace.SMEM),
            pl.BlockSpec(memory_space=pltpu.MemorySpace.SMEM),
        ],
        out_specs=pl.BlockSpec((b_tile, C, HWp), lambda n: (n, 0, 0)),
        scratch_shapes=[pltpu.VMEM((2, halo + HWp + halo), jnp.float32)],
    )
    out_flat = pl.pallas_call(
        kernel,
        out_shape=jax.ShapeDtypeStruct((N, C, HWp), x.dtype),
        grid_spec=grid_spec,
        compiler_params=pltpu.CompilerParams(
            dimension_semantics=("parallel",),
            vmem_limit_bytes=vmem_limit),
    )(x_flat, w_flat, bn_params)
    if HWp != HW:
        out_flat = out_flat[:, :, :HW]
    return out_flat.reshape(N, C, H, W)


def spatial_gate_reference(x, conv_w, bn_gamma, bn_beta, bn_mean, bn_var, eps=1e-5):
    xmax = jnp.max(x, axis=1, keepdims=True)
    xmean = jnp.mean(x, axis=1, keepdims=True)
    xc = jnp.concatenate([xmax, xmean], axis=1)                          # (N, 2, H, W)
    y = lax.conv_general_dilated(
        xc, conv_w, window_strides=(1, 1),
        padding=[(PAD, PAD), (PAD, PAD)],
        dimension_numbers=("NCHW", "OIHW", "NCHW"))
    y = (y - bn_mean[None, :, None, None]) / jnp.sqrt(bn_var[None, :, None, None] + eps)
    y = y * bn_gamma[None, :, None, None] + bn_beta[None, :, None, None]
    return x * jax.nn.sigmoid(y)


if __name__ == "__main__":
    key = jax.random.PRNGKey(0)
    kx, kw = jax.random.split(key)

    N, C, H, W = 2, 4, 16, 16
    x = jax.random.normal(kx, (N, C, H, W), jnp.float32)

    # Deterministic parameter init (shapes per module __init__):
    conv_w = 0.1 * jax.random.normal(kw, (1, 2, KSIZE, KSIZE), jnp.float32)  # Conv2d(2,1,7), bias=False
    bn_gamma = jnp.ones((1,), jnp.float32)   # BatchNorm2d(1) affine weight
    bn_beta = jnp.zeros((1,), jnp.float32)   # affine bias
    bn_mean = jnp.zeros((1,), jnp.float32)   # running_mean
    bn_var = jnp.ones((1,), jnp.float32)     # running_var

    out = spatial_gate(x, conv_w, bn_gamma, bn_beta, bn_mean, bn_var)
    out = jax.block_until_ready(out)

    ref = spatial_gate_reference(x, conv_w, bn_gamma, bn_beta, bn_mean, bn_var)
    np.testing.assert_allclose(np.asarray(out), np.asarray(ref), rtol=1e-5, atol=1e-5)

    print("KERNEL_OK")
</pallas_src>

<mosaic_0001>
module attributes {stable_mosaic.version = 11 : i64} {
  func.func @kernel(%arg0: i32, %arg1: memref<1x4x256xf32, #tpu.memory_space<vmem>>, %arg2: memref<98xf32, #tpu.memory_space<smem>>, %arg3: memref<2xf32, #tpu.memory_space<smem>>, %arg4: memref<1x4x256xf32, #tpu.memory_space<vmem>>, %arg5: memref<2x512xf32, #tpu.memory_space<vmem>>) attributes {dimension_semantics = [#tpu.dimension_semantics<parallel>], iteration_bounds = array<i64: 2>, scalar_prefetch = 0 : i64, scratch_operands = 1 : i64, tpu.core_type = #tpu.core_type<tc>, window_params = [{transform_indices = @transform_0, window_bounds = array<i64: 1, 4, 256>}, {transform_indices = @transform_1, window_bounds = array<i64: 98>}, {transform_indices = @transform_2, window_bounds = array<i64: 2>}, {transform_indices = @transform_3, window_bounds = array<i64: 1, 4, 256>}]} {
    %c0 = arith.constant 0 : index
    %0 = memref.load %arg3[%c0] : memref<2xf32, #tpu.memory_space<smem>>
    %c1 = arith.constant 1 : index
    %1 = memref.load %arg3[%c1] : memref<2xf32, #tpu.memory_space<smem>>
    %2 = tpu.iota {dimensions = array<i32: 1>} : vector<1x256xi32>
    %c16_i32 = arith.constant 16 : i32
    %c0_i32 = arith.constant 0 : i32
    %3 = arith.cmpi eq, %c16_i32, %c0_i32 : i32
    %c1_i32 = arith.constant 1 : i32
    %4 = arith.select %3, %c1_i32, %c16_i32 : i32
    %5 = vector.broadcast %4 : i32 to vector<1x256xi32>
    %6 = arith.remsi %2, %5 : vector<1x256xi32>
    %c0_i32_0 = arith.constant 0 : i32
    %7 = vector.broadcast %c0_i32_0 : i32 to vector<1x256xi32>
    %8 = arith.cmpi ne, %6, %7 : vector<1x256xi32>
    %c0_i32_1 = arith.constant 0 : i32
    %9 = vector.broadcast %c0_i32_1 : i32 to vector<1x256xi32>
    %10 = arith.cmpi slt, %6, %9 : vector<1x256xi32>
    %c0_i32_2 = arith.constant 0 : i32
    %11 = arith.cmpi slt, %4, %c0_i32_2 : i32
    %12 = vector.broadcast %11 : i1 to vector<1x256xi1>
    %13 = vector.broadcast %12 : vector<1x256xi1> to vector<1x256xi1>
    %14 = arith.xori %10, %13 : vector<1x256xi1>
    %15 = arith.andi %14, %8 : vector<1x256xi1>
    %16 = vector.broadcast %4 : i32 to vector<1x256xi32>
    %17 = arith.addi %6, %16 : vector<1x256xi32>
    %18 = arith.select %15, %17, %6 : vector<1x256xi1>, vector<1x256xi32>
    %c3_i32 = arith.constant 3 : i32
    %19 = vector.broadcast %c3_i32 : i32 to vector<1x256xi32>
    %20 = arith.cmpi sge, %18, %19 : vector<1x256xi32>
    %c2_i32 = arith.constant 2 : i32
    %21 = vector.broadcast %c2_i32 : i32 to vector<1x256xi32>
    %22 = arith.cmpi sge, %18, %21 : vector<1x256xi32>
    %c1_i32_3 = arith.constant 1 : i32
    %23 = vector.broadcast %c1_i32_3 : i32 to vector<1x256xi32>
    %24 = arith.cmpi sge, %18, %23 : vector<1x256xi32>
    %c15_i32 = arith.constant 15 : i32
    %25 = vector.broadcast %c15_i32 : i32 to vector<1x256xi32>
    %26 = arith.cmpi slt, %18, %25 : vector<1x256xi32>
    %c14_i32 = arith.constant 14 : i32
    %27 = vector.broadcast %c14_i32 : i32 to vector<1x256xi32>
    %28 = arith.cmpi slt, %18, %27 : vector<1x256xi32>
    %c13_i32 = arith.constant 13 : i32
    %29 = vector.broadcast %c13_i32 : i32 to vector<1x256xi32>
    %30 = arith.cmpi slt, %18, %29 : vector<1x256xi32>
    %31 = tpu.iota {dimensions = array<i32: 0>} : vector<2x256xi32>
    %c0_i32_4 = arith.constant 0 : i32
    %32 = vector.broadcast %c0_i32_4 : i32 to vector<2x256xi32>
    %33 = arith.cmpi eq, %31, %32 : vector<2x256xi32>
    %cst = arith.constant 0.000000e+00 : f32
    %34 = vector.broadcast %cst : f32 to vector<2x512xf32>
    %c0_5 = arith.constant 0 : index
    %c0_6 = arith.constant 0 : index
    %35 = vector.load %arg5[%c0_5, %c0_6] : memref<2x512xf32, #tpu.memory_space<vmem>>, vector<2x512xf32>
    tpu.vector_store %arg5[%c0_5, %c0_6], %34 {strides = array<i32>} : memref<2x512xf32, #tpu.memory_space<vmem>>, vector<2x512xf32>,
    %c0_7 = arith.constant 0 : index
    %c0_8 = arith.constant 0 : index
    %c0_9 = arith.constant 0 : index
    %36 = vector.load %arg1[%c0_7, %c0_8, %c0_9] : memref<1x4x256xf32, #tpu.memory_space<vmem>>, vector<1x4x256xf32>
    %37 = vector.shape_cast %36 : vector<1x4x256xf32> to vector<4x256xf32>
    %cst_10 = arith.constant dense<0xFF800000> : vector<256xf32>
    %38 = vector.multi_reduction <maximumf>, %37, %cst_10 [0] : vector<4x256xf32> to vector<256xf32>
    %39 = vector.shape_cast %38 : vector<256xf32> to vector<1x256xf32>
    %cst_11 = arith.constant dense<0.000000e+00> : vector<256xf32>
    %40 = vector.multi_reduction <add>, %37, %cst_11 [0] : vector<4x256xf32> to vector<256xf32>
    %41 = vector.shape_cast %40 : vector<256xf32> to vector<1x256xf32>
    %cst_12 = arith.constant 2.500000e-01 : f32
    %42 = vector.broadcast %cst_12 : f32 to vector<1x256xf32>
    %43 = arith.mulf %41, %42 : vector<1x256xf32>
    %c0_13 = arith.constant 0 : index
    %c128 = arith.constant 128 : index
    %44 = vector.load %arg5[%c0_13, %c128] : memref<2x512xf32, #tpu.memory_space<vmem>>, vector<1x256xf32>
    tpu.vector_store %arg5[%c0_13, %c128], %39 {strides = array<i32>} : memref<2x512xf32, #tpu.memory_space<vmem>>, vector<1x256xf32>,
    %c1_14 = arith.constant 1 : index
    %c128_15 = arith.constant 128 : index
    %45 = vector.load %arg5[%c1_14, %c128_15] : memref<2x512xf32, #tpu.memory_space<vmem>>, vector<1x256xf32>
    tpu.vector_store %arg5[%c1_14, %c128_15], %43 {strides = array<i32>} : memref<2x512xf32, #tpu.memory_space<vmem>>, vector<1x256xf32>,
    %cst_16 = arith.constant 0.000000e+00 : f32
    %46 = vector.broadcast %cst_16 : f32 to vector<2x256xf32>
    %cst_17 = arith.constant 0.000000e+00 : f32
    %47 = vector.broadcast %cst_17 : f32 to vector<2x256xf32>
    %c0_18 = arith.constant 0 : index
    %c77 = arith.constant 77 : index
    %48 = vector.load %arg5[%c0_18, %c77] : memref<2x512xf32, #tpu.memory_space<vmem>>, vector<2x256xf32>
    %c0_19 = arith.constant 0 : index
    %49 = memref.load %arg2[%c0_19] : memref<98xf32, #tpu.memory_space<smem>>
    %c49 = arith.constant 49 : index
    %50 = memref.load %arg2[%c49] : memref<98xf32, #tpu.memory_space<smem>>
    %51 = vector.broadcast %49 : f32 to vector<2x256xf32>
    %52 = vector.broadcast %50 : f32 to vector<2x256xf32>
    %53 = arith.select %33, %51, %52 : vector<2x256xi1>, vector<2x256xf32>
    %54 = arith.mulf %53, %48 : vector<2x256xf32>
    %55 = arith.addf %47, %54 : vector<2x256xf32>
    %c0_20 = arith.constant 0 : index
    %c93 = arith.constant 93 : index
    %56 = vector.load %arg5[%c0_20, %c93] : memref<2x512xf32, #tpu.memory_space<vmem>>, vector<2x256xf32>
    %c7 = arith.constant 7 : index
    %57 = memref.load %arg2[%c7] : memref<98xf32, #tpu.memory_space<smem>>
    %c56 = arith.constant 56 : index
    %58 = memref.load %arg2[%c56] : memref<98xf32, #tpu.memory_space<smem>>
    %59 = vector.broadcast %57 : f32 to vector<2x256xf32>
    %60 = vector.broadcast %58 : f32 to vector<2x256xf32>
    %61 = arith.select %33, %59, %60 : vector<2x256xi1>, vector<2x256xf32>
    %62 = arith.mulf %61, %56 : vector<2x256xf32>
    %63 = arith.addf %55, %62 : vector<2x256xf32>
    %c0_21 = arith.constant 0 : index
    %c109 = arith.constant 109 : index
    %64 = vector.load %arg5[%c0_21, %c109] : memref<2x512xf32, #tpu.memory_space<vmem>>, vector<2x256xf32>
    %c14 = arith.constant 14 : index
    %65 = memref.load %arg2[%c14] : memref<98xf32, #tpu.memory_space<smem>>
    %c63 = arith.constant 63 : index
    %66 = memref.load %arg2[%c63] : memref<98xf32, #tpu.memory_space<smem>>
    %67 = vector.broadcast %65 : f32 to vector<2x256xf32>
    %68 = vector.broadcast %66 : f32 to vector<2x256xf32>
    %69 = arith.select %33, %67, %68 : vector<2x256xi1>, vector<2x256xf32>
    %70 = arith.mulf %69, %64 : vector<2x256xf32>
    %71 = arith.addf %63, %70 : vector<2x256xf32>
    %c0_22 = arith.constant 0 : index
    %c125 = arith.constant 125 : index
    %72 = vector.load %arg5[%c0_22, %c125] : memref<2x512xf32, #tpu.memory_space<vmem>>, vector<2x256xf32>
    %c21 = arith.constant 21 : index
    %73 = memref.load %arg2[%c21] : memref<98xf32, #tpu.memory_space<smem>>
    %c70 = arith.constant 70 : index
    %74 = memref.load %arg2[%c70] : memref<98xf32, #tpu.memory_space<smem>>
    %75 = vector.broadcast %73 : f32 to vector<2x256xf32>
    %76 = vector.broadcast %74 : f32 to vector<2x256xf32>
    %77 = arith.select %33, %75, %76 : vector<2x256xi1>, vector<2x256xf32>
    %78 = arith.mulf %77, %72 : vector<2x256xf32>
    %79 = arith.addf %71, %78 : vector<2x256xf32>
    %c0_23 = arith.constant 0 : index
    %c141 = arith.constant 141 : index
    %80 = vector.load %arg5[%c0_23, %c141] : memref<2x512xf32, #tpu.memory_space<vmem>>, vector<2x256xf32>
    %c28 = arith.constant 28 : index
    %81 = memref.load %arg2[%c28] : memref<98xf32, #tpu.memory_space<smem>>
    %c77_24 = arith.constant 77 : index
    %82 = memref.load %arg2[%c77_24] : memref<98xf32, #tpu.memory_space<smem>>
    %83 = vector.broadcast %81 : f32 to vector<2x256xf32>
    %84 = vector.broadcast %82 : f32 to vector<2x256xf32>
    %85 = arith.select %33, %83, %84 : vector<2x256xi1>, vector<2x256xf32>
    %86 = arith.mulf %85, %80 : vector<2x256xf32>
    %87 = arith.addf %79, %86 : vector<2x256xf32>
    %c0_25 = arith.constant 0 : index
    %c157 = arith.constant 157 : index
    %88 = vector.load %arg5[%c0_25, %c157] : memref<2x512xf32, #tpu.memory_space<vmem>>, vector<2x256xf32>
    %c35 = arith.constant 35 : index
    %89 = memref.load %arg2[%c35] : memref<98xf32, #tpu.memory_space<smem>>
    %c84 = arith.constant 84 : index
    %90 = memref.load %arg2[%c84] : memref<98xf32, #tpu.memory_space<smem>>
    %91 = vector.broadcast %89 : f32 to vector<2x256xf32>
    %92 = vector.broadcast %90 : f32 to vector<2x256xf32>
    %93 = arith.select %33, %91, %92 : vector<2x256xi1>, vector<2x256xf32>
    %94 = arith.mulf %93, %88 : vector<2x256xf32>
    %95 = arith.addf %87, %94 : vector<2x256xf32>
    %c0_26 = arith.constant 0 : index
    %c173 = arith.constant 173 : index
    %96 = vector.load %arg5[%c0_26, %c173] : memref<2x512xf32, #tpu.memory_space<vmem>>, vector<2x256xf32>
    %c42 = arith.constant 42 : index
    %97 = memref.load %arg2[%c42] : memref<98xf32, #tpu.memory_space<smem>>
    %c91 = arith.constant 91 : index
    %98 = memref.load %arg2[%c91] : memref<98xf32, #tpu.memory_space<smem>>
    %99 = vector.broadcast %97 : f32 to vector<2x256xf32>
    %100 = vector.broadcast %98 : f32 to vector<2x256xf32>
    %101 = arith.select %33, %99, %100 : vector<2x256xi1>, vector<2x256xf32>
    %102 = arith.mulf %101, %96 : vector<2x256xf32>
    %103 = arith.addf %95, %102 : vector<2x256xf32>
    %cst_27 = arith.constant 0.000000e+00 : f32
    %104 = vector.shape_cast %20 : vector<1x256xi1> to vector<1x256xi1>
    %105 = vector.broadcast %104 : vector<1x256xi1> to vector<2x256xi1>
    %106 = vector.broadcast %cst_27 : f32 to vector<2x256xf32>
    %107 = arith.select %105, %103, %106 : vector<2x256xi1>, vector<2x256xf32>
    %108 = arith.addf %46, %107 : vector<2x256xf32>
    %cst_28 = arith.constant 0.000000e+00 : f32
    %109 = vector.broadcast %cst_28 : f32 to vector<2x256xf32>
    %c0_29 = arith.constant 0 : index
    %c78 = arith.constant 78 : index
    %110 = vector.load %arg5[%c0_29, %c78] : memref<2x512xf32, #tpu.memory_space<vmem>>, vector<2x256xf32>
    %c1_30 = arith.constant 1 : index
    %111 = memref.load %arg2[%c1_30] : memref<98xf32, #tpu.memory_space<smem>>
    %c50 = arith.constant 50 : index
    %112 = memref.load %arg2[%c50] : memref<98xf32, #tpu.memory_space<smem>>
    %113 = vector.broadcast %111 : f32 to vector<2x256xf32>
    %114 = vector.broadcast %112 : f32 to vector<2x256xf32>
    %115 = arith.select %33, %113, %114 : vector<2x256xi1>, vector<2x256xf32>
    %116 = arith.mulf %115, %110 : vector<2x256xf32>
    %117 = arith.addf %109, %116 : vector<2x256xf32>
    %c0_31 = arith.constant 0 : index
    %c94 = arith.constant 94 : index
    %118 = vector.load %arg5[%c0_31, %c94] : memref<2x512xf32, #tpu.memory_space<vmem>>, vector<2x256xf32>
    %c8 = arith.constant 8 : index
    %119 = memref.load %arg2[%c8] : memref<98xf32, #tpu.memory_space<smem>>
    %c57 = arith.constant 57 : index
    %120 = memref.load %arg2[%c57] : memref<98xf32, #tpu.memory_space<smem>>
    %121 = vector.broadcast %119 : f32 to vector<2x256xf32>
    %122 = vector.broadcast %120 : f32 to vector<2x256xf32>
    %123 = arith.select %33, %121, %122 : vector<2x256xi1>, vector<2x256xf32>
    %124 = arith.mulf %123, %118 : vector<2x256xf32>
    %125 = arith.addf %117, %124 : vector<2x256xf32>
    %c0_32 = arith.constant 0 : index
    %c110 = arith.constant 110 : index
    %126 = vector.load %arg5[%c0_32, %c110] : memref<2x512xf32, #tpu.memory_space<vmem>>, vector<2x256xf32>
    %c15 = arith.constant 15 : index
    %127 = memref.load %arg2[%c15] : memref<98xf32, #tpu.memory_space<smem>>
    %c64 = arith.constant 64 : index
    %128 = memref.load %arg2[%c64] : memref<98xf32, #tpu.memory_space<smem>>
    %129 = vector.broadcast %127 : f32 to vector<2x256xf32>
    %130 = vector.broadcast %128 : f32 to vector<2x256xf32>
    %131 = arith.select %33, %129, %130 : vector<2x256xi1>, vector<2x256xf32>
    %132 = arith.mulf %131, %126 : vector<2x256xf32>
    %133 = arith.addf %125, %132 : vector<2x256xf32>
    %c0_33 = arith.constant 0 : index
    %c126 = arith.constant 126 : index
    %134 = vector.load %arg5[%c0_33, %c126] : memref<2x512xf32, #tpu.memory_space<vmem>>, vector<2x256xf32>
    %c22 = arith.constant 22 : index
    %135 = memref.load %arg2[%c22] : memref<98xf32, #tpu.memory_space<smem>>
    %c71 = arith.constant 71 : index
    %136 = memref.load %arg2[%c71] : memref<98xf32, #tpu.memory_space<smem>>
    %137 = vector.broadcast %135 : f32 to vector<2x256xf32>
    %138 = vector.broadcast %136 : f32 to vector<2x256xf32>
    %139 = arith.select %33, %137, %138 : vector<2x256xi1>, vector<2x256xf32>
    %140 = arith.mulf %139, %134 : vector<2x256xf32>
    %141 = arith.addf %133, %140 : vector<2x256xf32>
    %c0_34 = arith.constant 0 : index
    %c142 = arith.constant 142 : index
    %142 = vector.load %arg5[%c0_34, %c142] : memref<2x512xf32, #tpu.memory_space<vmem>>, vector<2x256xf32>
    %c29 = arith.constant 29 : index
    %143 = memref.load %arg2[%c29] : memref<98xf32, #tpu.memory_space<smem>>
    %c78_35 = arith.constant 78 : index
    %144 = memref.load %arg2[%c78_35] : memref<98xf32, #tpu.memory_space<smem>>
    %145 = vector.broadcast %143 : f32 to vector<2x256xf32>
    %146 = vector.broadcast %144 : f32 to vector<2x256xf32>
    %147 = arith.select %33, %145, %146 : vector<2x256xi1>, vector<2x256xf32>
    %148 = arith.mulf %147, %142 : vector<2x256xf32>
    %149 = arith.addf %141, %148 : vector<2x256xf32>
    %c0_36 = arith.constant 0 : index
    %c158 = arith.constant 158 : index
    %150 = vector.load %arg5[%c0_36, %c158] : memref<2x512xf32, #tpu.memory_space<vmem>>, vector<2x256xf32>
    %c36 = arith.constant 36 : index
    %151 = memref.load %arg2[%c36] : memref<98xf32, #tpu.memory_space<smem>>
    %c85 = arith.constant 85 : index
    %152 = memref.load %arg2[%c85] : memref<98xf32, #tpu.memory_space<smem>>
    %153 = vector.broadcast %151 : f32 to vector<2x256xf32>
    %154 = vector.broadcast %152 : f32 to vector<2x256xf32>
    %155 = arith.select %33, %153, %154 : vector<2x256xi1>, vector<2x256xf32>
    %156 = arith.mulf %155, %150 : vector<2x256xf32>
    %157 = arith.addf %149, %156 : vector<2x256xf32>
    %c0_37 = arith.constant 0 : index
    %c174 = arith.constant 174 : index
    %158 = vector.load %arg5[%c0_37, %c174] : memref<2x512xf32, #tpu.memory_space<vmem>>, vector<2x256xf32>
    %c43 = arith.constant 43 : index
    %159 = memref.load %arg2[%c43] : memref<98xf32, #tpu.memory_space<smem>>
    %c92 = arith.constant 92 : index
    %160 = memref.load %arg2[%c92] : memref<98xf32, #tpu.memory_space<smem>>
    %161 = vector.broadcast %159 : f32 to vector<2x256xf32>
    %162 = vector.broadcast %160 : f32 to vector<2x256xf32>
    %163 = arith.select %33, %161, %162 : vector<2x256xi1>, vector<2x256xf32>
    %164 = arith.mulf %163, %158 : vector<2x256xf32>
    %165 = arith.addf %157, %164 : vector<2x256xf32>
    %cst_38 = arith.constant 0.000000e+00 : f32
    %166 = vector.shape_cast %22 : vector<1x256xi1> to vector<1x256xi1>
    %167 = vector.broadcast %166 : vector<1x256xi1> to vector<2x256xi1>
    %168 = vector.broadcast %cst_38 : f32 to vector<2x256xf32>
    %169 = arith.select %167, %165, %168 : vector<2x256xi1>, vector<2x256xf32>
    %170 = arith.addf %108, %169 : vector<2x256xf32>
    %cst_39 = arith.constant 0.000000e+00 : f32
    %171 = vector.broadcast %cst_39 : f32 to vector<2x256xf32>
    %c0_40 = arith.constant 0 : index
    %c79 = arith.constant 79 : index
    %172 = vector.load %arg5[%c0_40, %c79] : memref<2x512xf32, #tpu.memory_space<vmem>>, vector<2x256xf32>
    %c2 = arith.constant 2 : index
    %173 = memref.load %arg2[%c2] : memref<98xf32, #tpu.memory_space<smem>>
    %c51 = arith.constant 51 : index
    %174 = memref.load %arg2[%c51] : memref<98xf32, #tpu.memory_space<smem>>
    %175 = vector.broadcast %173 : f32 to vector<2x256xf32>
    %176 = vector.broadcast %174 : f32 to vector<2x256xf32>
    %177 = arith.select %33, %175, %176 : vector<2x256xi1>, vector<2x256xf32>
    %178 = arith.mulf %177, %172 : vector<2x256xf32>
    %179 = arith.addf %171, %178 : vector<2x256xf32>
    %c0_41 = arith.constant 0 : index
    %c95 = arith.constant 95 : index
    %180 = vector.load %arg5[%c0_41, %c95] : memref<2x512xf32, #tpu.memory_space<vmem>>, vector<2x256xf32>
    %c9 = arith.constant 9 : index
    %181 = memref.load %arg2[%c9] : memref<98xf32, #tpu.memory_space<smem>>
    %c58 = arith.constant 58 : index
    %182 = memref.load %arg2[%c58] : memref<98xf32, #tpu.memory_space<smem>>
    %183 = vector.broadcast %181 : f32 to vector<2x256xf32>
    %184 = vector.broadcast %182 : f32 to vector<2x256xf32>
    %185 = arith.select %33, %183, %184 : vector<2x256xi1>, vector<2x256xf32>
    %186 = arith.mulf %185, %180 : vector<2x256xf32>
    %187 = arith.addf %179, %186 : vector<2x256xf32>
    %c0_42 = arith.constant 0 : index
    %c111 = arith.constant 111 : index
    %188 = vector.load %arg5[%c0_42, %c111] : memref<2x512xf32, #tpu.memory_space<vmem>>, vector<2x256xf32>
    %c16 = arith.constant 16 : index
    %189 = memref.load %arg2[%c16] : memref<98xf32, #tpu.memory_space<smem>>
    %c65 = arith.constant 65 : index
    %190 = memref.load %arg2[%c65] : memref<98xf32, #tpu.memory_space<smem>>
    %191 = vector.broadcast %189 : f32 to vector<2x256xf32>
    %192 = vector.broadcast %190 : f32 to vector<2x256xf32>
    %193 = arith.select %33, %191, %192 : vector<2x256xi1>, vector<2x256xf32>
    %194 = arith.mulf %193, %188 : vector<2x256xf32>
    %195 = arith.addf %187, %194 : vector<2x256xf32>
    %c0_43 = arith.constant 0 : index
    %c127 = arith.constant 127 : index
    %196 = vector.load %arg5[%c0_43, %c127] : memref<2x512xf32, #tpu.memory_space<vmem>>, vector<2x256xf32>
    %c23 = arith.constant 23 : index
    %197 = memref.load %arg2[%c23] : memref<98xf32, #tpu.memory_space<smem>>
    %c72 = arith.constant 72 : index
    %198 = memref.load %arg2[%c72] : memref<98xf32, #tpu.memory_space<smem>>
    %199 = vector.broadcast %197 : f32 to vector<2x256xf32>
    %200 = vector.broadcast %198 : f32 to vector<2x256xf32>
    %201 = arith.select %33, %199, %200 : vector<2x256xi1>, vector<2x256xf32>
    %202 = arith.mulf %201, %196 : vector<2x256xf32>
    %203 = arith.addf %195, %202 : vector<2x256xf32>
    %c0_44 = arith.constant 0 : index
    %c143 = arith.constant 143 : index
    %204 = vector.load %arg5[%c0_44, %c143] : memref<2x512xf32, #tpu.memory_space<vmem>>, vector<2x256xf32>
    %c30 = arith.constant 30 : index
    %205 = memref.load %arg2[%c30] : memref<98xf32, #tpu.memory_space<smem>>
    %c79_45 = arith.constant 79 : index
    %206 = memref.load %arg2[%c79_45] : memref<98xf32, #tpu.memory_space<smem>>
    %207 = vector.broadcast %205 : f32 to vector<2x256xf32>
    %208 = vector.broadcast %206 : f32 to vector<2x256xf32>
    %209 = arith.select %33, %207, %208 : vector<2x256xi1>, vector<2x256xf32>
    %210 = arith.mulf %209, %204 : vector<2x256xf32>
    %211 = arith.addf %203, %210 : vector<2x256xf32>
    %c0_46 = arith.constant 0 : index
    %c159 = arith.constant 159 : index
    %212 = vector.load %arg5[%c0_46, %c159] : memref<2x512xf32, #tpu.memory_space<vmem>>, vector<2x256xf32>
    %c37 = arith.constant 37 : index
    %213 = memref.load %arg2[%c37] : memref<98xf32, #tpu.memory_space<smem>>
    %c86 = arith.constant 86 : index
    %214 = memref.load %arg2[%c86] : memref<98xf32, #tpu.memory_space<smem>>
    %215 = vector.broadcast %213 : f32 to vector<2x256xf32>
    %216 = vector.broadcast %214 : f32 to vector<2x256xf32>
    %217 = arith.select %33, %215, %216 : vector<2x256xi1>, vector<2x256xf32>
    %218 = arith.mulf %217, %212 : vector<2x256xf32>
    %219 = arith.addf %211, %218 : vector<2x256xf32>
    %c0_47 = arith.constant 0 : index
    %c175 = arith.constant 175 : index
    %220 = vector.load %arg5[%c0_47, %c175] : memref<2x512xf32, #tpu.memory_space<vmem>>, vector<2x256xf32>
    %c44 = arith.constant 44 : index
    %221 = memref.load %arg2[%c44] : memref<98xf32, #tpu.memory_space<smem>>
    %c93_48 = arith.constant 93 : index
    %222 = memref.load %arg2[%c93_48] : memref<98xf32, #tpu.memory_space<smem>>
    %223 = vector.broadcast %221 : f32 to vector<2x256xf32>
    %224 = vector.broadcast %222 : f32 to vector<2x256xf32>
    %225 = arith.select %33, %223, %224 : vector<2x256xi1>, vector<2x256xf32>
    %226 = arith.mulf %225, %220 : vector<2x256xf32>
    %227 = arith.addf %219, %226 : vector<2x256xf32>
    %cst_49 = arith.constant 0.000000e+00 : f32
    %228 = vector.shape_cast %24 : vector<1x256xi1> to vector<1x256xi1>
    %229 = vector.broadcast %228 : vector<1x256xi1> to vector<2x256xi1>
    %230 = vector.broadcast %cst_49 : f32 to vector<2x256xf32>
    %231 = arith.select %229, %227, %230 : vector<2x256xi1>, vector<2x256xf32>
    %232 = arith.addf %170, %231 : vector<2x256xf32>
    %cst_50 = arith.constant 0.000000e+00 : f32
    %233 = vector.broadcast %cst_50 : f32 to vector<2x256xf32>
    %c0_51 = arith.constant 0 : index
    %c80 = arith.constant 80 : index
    %234 = vector.load %arg5[%c0_51, %c80] : memref<2x512xf32, #tpu.memory_space<vmem>>, vector<2x256xf32>
    %c3 = arith.constant 3 : index
    %235 = memref.load %arg2[%c3] : memref<98xf32, #tpu.memory_space<smem>>
    %c52 = arith.constant 52 : index
    %236 = memref.load %arg2[%c52] : memref<98xf32, #tpu.memory_space<smem>>
    %237 = vector.broadcast %235 : f32 to vector<2x256xf32>
    %238 = vector.broadcast %236 : f32 to vector<2x256xf32>
    %239 = arith.select %33, %237, %238 : vector<2x256xi1>, vector<2x256xf32>
    %240 = arith.mulf %239, %234 : vector<2x256xf32>
    %241 = arith.addf %233, %240 : vector<2x256xf32>
    %c0_52 = arith.constant 0 : index
    %c96 = arith.constant 96 : index
    %242 = vector.load %arg5[%c0_52, %c96] : memref<2x512xf32, #tpu.memory_space<vmem>>, vector<2x256xf32>
    %c10 = arith.constant 10 : index
    %243 = memref.load %arg2[%c10] : memref<98xf32, #tpu.memory_space<smem>>
    %c59 = arith.constant 59 : index
    %244 = memref.load %arg2[%c59] : memref<98xf32, #tpu.memory_space<smem>>
    %245 = vector.broadcast %243 : f32 to vector<2x256xf32>
    %246 = vector.broadcast %244 : f32 to vector<2x256xf32>
    %247 = arith.select %33, %245, %246 : vector<2x256xi1>, vector<2x256xf32>
    %248 = arith.mulf %247, %242 : vector<2x256xf32>
    %249 = arith.addf %241, %248 : vector<2x256xf32>
    %c0_53 = arith.constant 0 : index
    %c112 = arith.constant 112 : index
    %250 = vector.load %arg5[%c0_53, %c112] : memref<2x512xf32, #tpu.memory_space<vmem>>, vector<2x256xf32>
    %c17 = arith.constant 17 : index
    %251 = memref.load %arg2[%c17] : memref<98xf32, #tpu.memory_space<smem>>
    %c66 = arith.constant 66 : index
    %252 = memref.load %arg2[%c66] : memref<98xf32, #tpu.memory_space<smem>>
    %253 = vector.broadcast %251 : f32 to vector<2x256xf32>
    %254 = vector.broadcast %252 : f32 to vector<2x256xf32>
    %255 = arith.select %33, %253, %254 : vector<2x256xi1>, vector<2x256xf32>
    %256 = arith.mulf %255, %250 : vector<2x256xf32>
    %257 = arith.addf %249, %256 : vector<2x256xf32>
    %c0_54 = arith.constant 0 : index
    %c128_55 = arith.constant 128 : index
    %258 = vector.load %arg5[%c0_54, %c128_55] : memref<2x512xf32, #tpu.memory_space<vmem>>, vector<2x256xf32>
    %c24 = arith.constant 24 : index
    %259 = memref.load %arg2[%c24] : memref<98xf32, #tpu.memory_space<smem>>
    %c73 = arith.constant 73 : index
    %260 = memref.load %arg2[%c73] : memref<98xf32, #tpu.memory_space<smem>>
    %261 = vector.broadcast %259 : f32 to vector<2x256xf32>
    %262 = vector.broadcast %260 : f32 to vector<2x256xf32>
    %263 = arith.select %33, %261, %262 : vector<2x256xi1>, vector<2x256xf32>
    %264 = arith.mulf %263, %258 : vector<2x256xf32>
    %265 = arith.addf %257, %264 : vector<2x256xf32>
    %c0_56 = arith.constant 0 : index
    %c144 = arith.constant 144 : index
    %266 = vector.load %arg5[%c0_56, %c144] : memref<2x512xf32, #tpu.memory_space<vmem>>, vector<2x256xf32>
    %c31 = arith.constant 31 : index
    %267 = memref.load %arg2[%c31] : memref<98xf32, #tpu.memory_space<smem>>
    %c80_57 = arith.constant 80 : index
    %268 = memref.load %arg2[%c80_57] : memref<98xf32, #tpu.memory_space<smem>>
    %269 = vector.broadcast %267 : f32 to vector<2x256xf32>
    %270 = vector.broadcast %268 : f32 to vector<2x256xf32>
    %271 = arith.select %33, %269, %270 : vector<2x256xi1>, vector<2x256xf32>
    %272 = arith.mulf %271, %266 : vector<2x256xf32>
    %273 = arith.addf %265, %272 : vector<2x256xf32>
    %c0_58 = arith.constant 0 : index
    %c160 = arith.constant 160 : index
    %274 = vector.load %arg5[%c0_58, %c160] : memref<2x512xf32, #tpu.memory_space<vmem>>, vector<2x256xf32>
    %c38 = arith.constant 38 : index
    %275 = memref.load %arg2[%c38] : memref<98xf32, #tpu.memory_space<smem>>
    %c87 = arith.constant 87 : index
    %276 = memref.load %arg2[%c87] : memref<98xf32, #tpu.memory_space<smem>>
    %277 = vector.broadcast %275 : f32 to vector<2x256xf32>
    %278 = vector.broadcast %276 : f32 to vector<2x256xf32>
    %279 = arith.select %33, %277, %278 : vector<2x256xi1>, vector<2x256xf32>
    %280 = arith.mulf %279, %274 : vector<2x256xf32>
    %281 = arith.addf %273, %280 : vector<2x256xf32>
    %c0_59 = arith.constant 0 : index
    %c176 = arith.constant 176 : index
    %282 = vector.load %arg5[%c0_59, %c176] : memref<2x512xf32, #tpu.memory_space<vmem>>, vector<2x256xf32>
    %c45 = arith.constant 45 : index
    %283 = memref.load %arg2[%c45] : memref<98xf32, #tpu.memory_space<smem>>
    %c94_60 = arith.constant 94 : index
    %284 = memref.load %arg2[%c94_60] : memref<98xf32, #tpu.memory_space<smem>>
    %285 = vector.broadcast %283 : f32 to vector<2x256xf32>
    %286 = vector.broadcast %284 : f32 to vector<2x256xf32>
    %287 = arith.select %33, %285, %286 : vector<2x256xi1>, vector<2x256xf32>
    %288 = arith.mulf %287, %282 : vector<2x256xf32>
    %289 = arith.addf %281, %288 : vector<2x256xf32>
    %290 = arith.addf %232, %289 : vector<2x256xf32>
    %cst_61 = arith.constant 0.000000e+00 : f32
    %291 = vector.broadcast %cst_61 : f32 to vector<2x256xf32>
    %c0_62 = arith.constant 0 : index
    %c81 = arith.constant 81 : index
    %292 = vector.load %arg5[%c0_62, %c81] : memref<2x512xf32, #tpu.memory_space<vmem>>, vector<2x256xf32>
    %c4 = arith.constant 4 : index
    %293 = memref.load %arg2[%c4] : memref<98xf32, #tpu.memory_space<smem>>
    %c53 = arith.constant 53 : index
    %294 = memref.load %arg2[%c53] : memref<98xf32, #tpu.memory_space<smem>>
    %295 = vector.broadcast %293 : f32 to vector<2x256xf32>
    %296 = vector.broadcast %294 : f32 to vector<2x256xf32>
    %297 = arith.select %33, %295, %296 : vector<2x256xi1>, vector<2x256xf32>
    %298 = arith.mulf %297, %292 : vector<2x256xf32>
    %299 = arith.addf %291, %298 : vector<2x256xf32>
    %c0_63 = arith.constant 0 : index
    %c97 = arith.constant 97 : index
    %300 = vector.load %arg5[%c0_63, %c97] : memref<2x512xf32, #tpu.memory_space<vmem>>, vector<2x256xf32>
    %c11 = arith.constant 11 : index
    %301 = memref.load %arg2[%c11] : memref<98xf32, #tpu.memory_space<smem>>
    %c60 = arith.constant 60 : index
    %302 = memref.load %arg2[%c60] : memref<98xf32, #tpu.memory_space<smem>>
    %303 = vector.broadcast %301 : f32 to vector<2x256xf32>
    %304 = vector.broadcast %302 : f32 to vector<2x256xf32>
    %305 = arith.select %33, %303, %304 : vector<2x256xi1>, vector<2x256xf32>
    %306 = arith.mulf %305, %300 : vector<2x256xf32>
    %307 = arith.addf %299, %306 : vector<2x256xf32>
    %c0_64 = arith.constant 0 : index
    %c113 = arith.constant 113 : index
    %308 = vector.load %arg5[%c0_64, %c113] : memref<2x512xf32, #tpu.memory_space<vmem>>, vector<2x256xf32>
    %c18 = arith.constant 18 : index
    %309 = memref.load %arg2[%c18] : memref<98xf32, #tpu.memory_space<smem>>
    %c67 = arith.constant 67 : index
    %310 = memref.load %arg2[%c67] : memref<98xf32, #tpu.memory_space<smem>>
    %311 = vector.broadcast %309 : f32 to vector<2x256xf32>
    %312 = vector.broadcast %310 : f32 to vector<2x256xf32>
    %313 = arith.select %33, %311, %312 : vector<2x256xi1>, vector<2x256xf32>
    %314 = arith.mulf %313, %308 : vector<2x256xf32>
    %315 = arith.addf %307, %314 : vector<2x256xf32>
    %c0_65 = arith.constant 0 : index
    %c129 = arith.constant 129 : index
    %316 = vector.load %arg5[%c0_65, %c129] : memref<2x512xf32, #tpu.memory_space<vmem>>, vector<2x256xf32>
    %c25 = arith.constant 25 : index
    %317 = memref.load %arg2[%c25] : memref<98xf32, #tpu.memory_space<smem>>
    %c74 = arith.constant 74 : index
    %318 = memref.load %arg2[%c74] : memref<98xf32, #tpu.memory_space<smem>>
    %319 = vector.broadcast %317 : f32 to vector<2x256xf32>
    %320 = vector.broadcast %318 : f32 to vector<2x256xf32>
    %321 = arith.select %33, %319, %320 : vector<2x256xi1>, vector<2x256xf32>
    %322 = arith.mulf %321, %316 : vector<2x256xf32>
    %323 = arith.addf %315, %322 : vector<2x256xf32>
    %c0_66 = arith.constant 0 : index
    %c145 = arith.constant 145 : index
    %324 = vector.load %arg5[%c0_66, %c145] : memref<2x512xf32, #tpu.memory_space<vmem>>, vector<2x256xf32>
    %c32 = arith.constant 32 : index
    %325 = memref.load %arg2[%c32] : memref<98xf32, #tpu.memory_space<smem>>
    %c81_67 = arith.constant 81 : index
    %326 = memref.load %arg2[%c81_67] : memref<98xf32, #tpu.memory_space<smem>>
    %327 = vector.broadcast %325 : f32 to vector<2x256xf32>
    %328 = vector.broadcast %326 : f32 to vector<2x256xf32>
    %329 = arith.select %33, %327, %328 : vector<2x256xi1>, vector<2x256xf32>
    %330 = arith.mulf %329, %324 : vector<2x256xf32>
    %331 = arith.addf %323, %330 : vector<2x256xf32>
    %c0_68 = arith.constant 0 : index
    %c161 = arith.constant 161 : index
    %332 = vector.load %arg5[%c0_68, %c161] : memref<2x512xf32, #tpu.memory_space<vmem>>, vector<2x256xf32>
    %c39 = arith.constant 39 : index
    %333 = memref.load %arg2[%c39] : memref<98xf32, #tpu.memory_space<smem>>
    %c88 = arith.constant 88 : index
    %334 = memref.load %arg2[%c88] : memref<98xf32, #tpu.memory_space<smem>>
    %335 = vector.broadcast %333 : f32 to vector<2x256xf32>
    %336 = vector.broadcast %334 : f32 to vector<2x256xf32>
    %337 = arith.select %33, %335, %336 : vector<2x256xi1>, vector<2x256xf32>
    %338 = arith.mulf %337, %332 : vector<2x256xf32>
    %339 = arith.addf %331, %338 : vector<2x256xf32>
    %c0_69 = arith.constant 0 : index
    %c177 = arith.constant 177 : index
    %340 = vector.load %arg5[%c0_69, %c177] : memref<2x512xf32, #tpu.memory_space<vmem>>, vector<2x256xf32>
    %c46 = arith.constant 46 : index
    %341 = memref.load %arg2[%c46] : memref<98xf32, #tpu.memory_space<smem>>
    %c95_70 = arith.constant 95 : index
    %342 = memref.load %arg2[%c95_70] : memref<98xf32, #tpu.memory_space<smem>>
    %343 = vector.broadcast %341 : f32 to vector<2x256xf32>
    %344 = vector.broadcast %342 : f32 to vector<2x256xf32>
    %345 = arith.select %33, %343, %344 : vector<2x256xi1>, vector<2x256xf32>
    %346 = arith.mulf %345, %340 : vector<2x256xf32>
    %347 = arith.addf %339, %346 : vector<2x256xf32>
    %cst_71 = arith.constant 0.000000e+00 : f32
    %348 = vector.shape_cast %26 : vector<1x256xi1> to vector<1x256xi1>
    %349 = vector.broadcast %348 : vector<1x256xi1> to vector<2x256xi1>
    %350 = vector.broadcast %cst_71 : f32 to vector<2x256xf32>
    %351 = arith.select %349, %347, %350 : vector<2x256xi1>, vector<2x256xf32>
    %352 = arith.addf %290, %351 : vector<2x256xf32>
    %cst_72 = arith.constant 0.000000e+00 : f32
    %353 = vector.broadcast %cst_72 : f32 to vector<2x256xf32>
    %c0_73 = arith.constant 0 : index
    %c82 = arith.constant 82 : index
    %354 = vector.load %arg5[%c0_73, %c82] : memref<2x512xf32, #tpu.memory_space<vmem>>, vector<2x256xf32>
    %c5 = arith.constant 5 : index
    %355 = memref.load %arg2[%c5] : memref<98xf32, #tpu.memory_space<smem>>
    %c54 = arith.constant 54 : index
    %356 = memref.load %arg2[%c54] : memref<98xf32, #tpu.memory_space<smem>>
    %357 = vector.broadcast %355 : f32 to vector<2x256xf32>
    %358 = vector.broadcast %356 : f32 to vector<2x256xf32>
    %359 = arith.select %33, %357, %358 : vector<2x256xi1>, vector<2x256xf32>
    %360 = arith.mulf %359, %354 : vector<2x256xf32>
    %361 = arith.addf %353, %360 : vector<2x256xf32>
    %c0_74 = arith.constant 0 : index
    %c98 = arith.constant 98 : index
    %362 = vector.load %arg5[%c0_74, %c98] : memref<2x512xf32, #tpu.memory_space<vmem>>, vector<2x256xf32>
    %c12 = arith.constant 12 : index
    %363 = memref.load %arg2[%c12] : memref<98xf32, #tpu.memory_space<smem>>
    %c61 = arith.constant 61 : index
    %364 = memref.load %arg2[%c61] : memref<98xf32, #tpu.memory_space<smem>>
    %365 = vector.broadcast %363 : f32 to vector<2x256xf32>
    %366 = vector.broadcast %364 : f32 to vector<2x256xf32>
    %367 = arith.select %33, %365, %366 : vector<2x256xi1>, vector<2x256xf32>
    %368 = arith.mulf %367, %362 : vector<2x256xf32>
    %369 = arith.addf %361, %368 : vector<2x256xf32>
    %c0_75 = arith.constant 0 : index
    %c114 = arith.constant 114 : index
    %370 = vector.load %arg5[%c0_75, %c114] : memref<2x512xf32, #tpu.memory_space<vmem>>, vector<2x256xf32>
    %c19 = arith.constant 19 : index
    %371 = memref.load %arg2[%c19] : memref<98xf32, #tpu.memory_space<smem>>
    %c68 = arith.constant 68 : index
    %372 = memref.load %arg2[%c68] : memref<98xf32, #tpu.memory_space<smem>>
    %373 = vector.broadcast %371 : f32 to vector<2x256xf32>
    %374 = vector.broadcast %372 : f32 to vector<2x256xf32>
    %375 = arith.select %33, %373, %374 : vector<2x256xi1>, vector<2x256xf32>
    %376 = arith.mulf %375, %370 : vector<2x256xf32>
    %377 = arith.addf %369, %376 : vector<2x256xf32>
    %c0_76 = arith.constant 0 : index
    %c130 = arith.constant 130 : index
    %378 = vector.load %arg5[%c0_76, %c130] : memref<2x512xf32, #tpu.memory_space<vmem>>, vector<2x256xf32>
    %c26 = arith.constant 26 : index
    %379 = memref.load %arg2[%c26] : memref<98xf32, #tpu.memory_space<smem>>
    %c75 = arith.constant 75 : index
    %380 = memref.load %arg2[%c75] : memref<98xf32, #tpu.memory_space<smem>>
    %381 = vector.broadcast %379 : f32 to vector<2x256xf32>
    %382 = vector.broadcast %380 : f32 to vector<2x256xf32>
    %383 = arith.select %33, %381, %382 : vector<2x256xi1>, vector<2x256xf32>
    %384 = arith.mulf %383, %378 : vector<2x256xf32>
    %385 = arith.addf %377, %384 : vector<2x256xf32>
    %c0_77 = arith.constant 0 : index
    %c146 = arith.constant 146 : index
    %386 = vector.load %arg5[%c0_77, %c146] : memref<2x512xf32, #tpu.memory_space<vmem>>, vector<2x256xf32>
    %c33 = arith.constant 33 : index
    %387 = memref.load %arg2[%c33] : memref<98xf32, #tpu.memory_space<smem>>
    %c82_78 = arith.constant 82 : index
    %388 = memref.load %arg2[%c82_78] : memref<98xf32, #tpu.memory_space<smem>>
    %389 = vector.broadcast %387 : f32 to vector<2x256xf32>
    %390 = vector.broadcast %388 : f32 to vector<2x256xf32>
    %391 = arith.select %33, %389, %390 : vector<2x256xi1>, vector<2x256xf32>
    %392 = arith.mulf %391, %386 : vector<2x256xf32>
    %393 = arith.addf %385, %392 : vector<2x256xf32>
    %c0_79 = arith.constant 0 : index
    %c162 = arith.constant 162 : index
    %394 = vector.load %arg5[%c0_79, %c162] : memref<2x512xf32, #tpu.memory_space<vmem>>, vector<2x256xf32>
    %c40 = arith.constant 40 : index
    %395 = memref.load %arg2[%c40] : memref<98xf32, #tpu.memory_space<smem>>
    %c89 = arith.constant 89 : index
    %396 = memref.load %arg2[%c89] : memref<98xf32, #tpu.memory_space<smem>>
    %397 = vector.broadcast %395 : f32 to vector<2x256xf32>
    %398 = vector.broadcast %396 : f32 to vector<2x256xf32>
    %399 = arith.select %33, %397, %398 : vector<2x256xi1>, vector<2x256xf32>
    %400 = arith.mulf %399, %394 : vector<2x256xf32>
    %401 = arith.addf %393, %400 : vector<2x256xf32>
    %c0_80 = arith.constant 0 : index
    %c178 = arith.constant 178 : index
    %402 = vector.load %arg5[%c0_80, %c178] : memref<2x512xf32, #tpu.memory_space<vmem>>, vector<2x256xf32>
    %c47 = arith.constant 47 : index
    %403 = memref.load %arg2[%c47] : memref<98xf32, #tpu.memory_space<smem>>
    %c96_81 = arith.constant 96 : index
    %404 = memref.load %arg2[%c96_81] : memref<98xf32, #tpu.memory_space<smem>>
    %405 = vector.broadcast %403 : f32 to vector<2x256xf32>
    %406 = vector.broadcast %404 : f32 to vector<2x256xf32>
    %407 = arith.select %33, %405, %406 : vector<2x256xi1>, vector<2x256xf32>
    %408 = arith.mulf %407, %402 : vector<2x256xf32>
    %409 = arith.addf %401, %408 : vector<2x256xf32>
    %cst_82 = arith.constant 0.000000e+00 : f32
    %410 = vector.shape_cast %28 : vector<1x256xi1> to vector<1x256xi1>
    %411 = vector.broadcast %410 : vector<1x256xi1> to vector<2x256xi1>
    %412 = vector.broadcast %cst_82 : f32 to vector<2x256xf32>
    %413 = arith.select %411, %409, %412 : vector<2x256xi1>, vector<2x256xf32>
    %414 = arith.addf %352, %413 : vector<2x256xf32>
    %cst_83 = arith.constant 0.000000e+00 : f32
    %415 = vector.broadcast %cst_83 : f32 to vector<2x256xf32>
    %c0_84 = arith.constant 0 : index
    %c83 = arith.constant 83 : index
    %416 = vector.load %arg5[%c0_84, %c83] : memref<2x512xf32, #tpu.memory_space<vmem>>, vector<2x256xf32>
    %c6 = arith.constant 6 : index
    %417 = memref.load %arg2[%c6] : memref<98xf32, #tpu.memory_space<smem>>
    %c55 = arith.constant 55 : index
    %418 = memref.load %arg2[%c55] : memref<98xf32, #tpu.memory_space<smem>>
    %419 = vector.broadcast %417 : f32 to vector<2x256xf32>
    %420 = vector.broadcast %418 : f32 to vector<2x256xf32>
    %421 = arith.select %33, %419, %420 : vector<2x256xi1>, vector<2x256xf32>
    %422 = arith.mulf %421, %416 : vector<2x256xf32>
    %423 = arith.addf %415, %422 : vector<2x256xf32>
    %c0_85 = arith.constant 0 : index
    %c99 = arith.constant 99 : index
    %424 = vector.load %arg5[%c0_85, %c99] : memref<2x512xf32, #tpu.memory_space<vmem>>, vector<2x256xf32>
    %c13 = arith.constant 13 : index
    %425 = memref.load %arg2[%c13] : memref<98xf32, #tpu.memory_space<smem>>
    %c62 = arith.constant 62 : index
    %426 = memref.load %arg2[%c62] : memref<98xf32, #tpu.memory_space<smem>>
    %427 = vector.broadcast %425 : f32 to vector<2x256xf32>
    %428 = vector.broadcast %426 : f32 to vector<2x256xf32>
    %429 = arith.select %33, %427, %428 : vector<2x256xi1>, vector<2x256xf32>
    %430 = arith.mulf %429, %424 : vector<2x256xf32>
    %431 = arith.addf %423, %430 : vector<2x256xf32>
    %c0_86 = arith.constant 0 : index
    %c115 = arith.constant 115 : index
    %432 = vector.load %arg5[%c0_86, %c115] : memref<2x512xf32, #tpu.memory_space<vmem>>, vector<2x256xf32>
    %c20 = arith.constant 20 : index
    %433 = memref.load %arg2[%c20] : memref<98xf32, #tpu.memory_space<smem>>
    %c69 = arith.constant 69 : index
    %434 = memref.load %arg2[%c69] : memref<98xf32, #tpu.memory_space<smem>>
    %435 = vector.broadcast %433 : f32 to vector<2x256xf32>
    %436 = vector.broadcast %434 : f32 to vector<2x256xf32>
    %437 = arith.select %33, %435, %436 : vector<2x256xi1>, vector<2x256xf32>
    %438 = arith.mulf %437, %432 : vector<2x256xf32>
    %439 = arith.addf %431, %438 : vector<2x256xf32>
    %c0_87 = arith.constant 0 : index
    %c131 = arith.constant 131 : index
    %440 = vector.load %arg5[%c0_87, %c131] : memref<2x512xf32, #tpu.memory_space<vmem>>, vector<2x256xf32>
    %c27 = arith.constant 27 : index
    %441 = memref.load %arg2[%c27] : memref<98xf32, #tpu.memory_space<smem>>
    %c76 = arith.constant 76 : index
    %442 = memref.load %arg2[%c76] : memref<98xf32, #tpu.memory_space<smem>>
    %443 = vector.broadcast %441 : f32 to vector<2x256xf32>
    %444 = vector.broadcast %442 : f32 to vector<2x256xf32>
    %445 = arith.select %33, %443, %444 : vector<2x256xi1>, vector<2x256xf32>
    %446 = arith.mulf %445, %440 : vector<2x256xf32>
    %447 = arith.addf %439, %446 : vector<2x256xf32>
    %c0_88 = arith.constant 0 : index
    %c147 = arith.constant 147 : index
    %448 = vector.load %arg5[%c0_88, %c147] : memref<2x512xf32, #tpu.memory_space<vmem>>, vector<2x256xf32>
    %c34 = arith.constant 34 : index
    %449 = memref.load %arg2[%c34] : memref<98xf32, #tpu.memory_space<smem>>
    %c83_89 = arith.constant 83 : index
    %450 = memref.load %arg2[%c83_89] : memref<98xf32, #tpu.memory_space<smem>>
    %451 = vector.broadcast %449 : f32 to vector<2x256xf32>
    %452 = vector.broadcast %450 : f32 to vector<2x256xf32>
    %453 = arith.select %33, %451, %452 : vector<2x256xi1>, vector<2x256xf32>
    %454 = arith.mulf %453, %448 : vector<2x256xf32>
    %455 = arith.addf %447, %454 : vector<2x256xf32>
    %c0_90 = arith.constant 0 : index
    %c163 = arith.constant 163 : index
    %456 = vector.load %arg5[%c0_90, %c163] : memref<2x512xf32, #tpu.memory_space<vmem>>, vector<2x256xf32>
    %c41 = arith.constant 41 : index
    %457 = memref.load %arg2[%c41] : memref<98xf32, #tpu.memory_space<smem>>
    %c90 = arith.constant 90 : index
    %458 = memref.load %arg2[%c90] : memref<98xf32, #tpu.memory_space<smem>>
    %459 = vector.broadcast %457 : f32 to vector<2x256xf32>
    %460 = vector.broadcast %458 : f32 to vector<2x256xf32>
    %461 = arith.select %33, %459, %460 : vector<2x256xi1>, vector<2x256xf32>
    %462 = arith.mulf %461, %456 : vector<2x256xf32>
    %463 = arith.addf %455, %462 : vector<2x256xf32>
    %c0_91 = arith.constant 0 : index
    %c179 = arith.constant 179 : index
    %464 = vector.load %arg5[%c0_91, %c179] : memref<2x512xf32, #tpu.memory_space<vmem>>, vector<2x256xf32>
    %c48 = arith.constant 48 : index
    %465 = memref.load %arg2[%c48] : memref<98xf32, #tpu.memory_space<smem>>
    %c97_92 = arith.constant 97 : index
    %466 = memref.load %arg2[%c97_92] : memref<98xf32, #tpu.memory_space<smem>>
    %467 = vector.broadcast %465 : f32 to vector<2x256xf32>
    %468 = vector.broadcast %466 : f32 to vector<2x256xf32>
    %469 = arith.select %33, %467, %468 : vector<2x256xi1>, vector<2x256xf32>
    %470 = arith.mulf %469, %464 : vector<2x256xf32>
    %471 = arith.addf %463, %470 : vector<2x256xf32>
    %cst_93 = arith.constant 0.000000e+00 : f32
    %472 = vector.shape_cast %30 : vector<1x256xi1> to vector<1x256xi1>
    %473 = vector.broadcast %472 : vector<1x256xi1> to vector<2x256xi1>
    %474 = vector.broadcast %cst_93 : f32 to vector<2x256xf32>
    %475 = arith.select %473, %471, %474 : vector<2x256xi1>, vector<2x256xf32>
    %476 = arith.addf %414, %475 : vector<2x256xf32>
    %cst_94 = arith.constant dense<0.000000e+00> : vector<256xf32>
    %477 = vector.multi_reduction <add>, %476, %cst_94 [0] : vector<2x256xf32> to vector<256xf32>
    %478 = vector.shape_cast %477 : vector<256xf32> to vector<1x256xf32>
    %479 = vector.broadcast %0 : f32 to vector<1x256xf32>
    %480 = arith.mulf %478, %479 : vector<1x256xf32>
    %481 = vector.broadcast %1 : f32 to vector<1x256xf32>
    %482 = arith.addf %480, %481 : vector<1x256xf32>
    %483 = arith.negf %482 : vector<1x256xf32>
    %484 = math.exp %483 : vector<1x256xf32>
    %cst_95 = arith.constant 1.000000e+00 : f32
    %485 = vector.broadcast %cst_95 : f32 to vector<1x256xf32>
    %486 = arith.addf %485, %484 : vector<1x256xf32>
    %487 = arith.divf %485, %486 : vector<1x256xf32>
    %c0_96 = arith.constant 0 : index
    %c0_97 = arith.constant 0 : index
    %c0_98 = arith.constant 0 : index
    %488 = vector.load %arg1[%c0_96, %c0_97, %c0_98] : memref<1x4x256xf32, #tpu.memory_space<vmem>>, vector<1x4x256xf32>
    %489 = vector.shape_cast %488 : vector<1x4x256xf32> to vector<4x256xf32>
    %490 = vector.broadcast %487 : vector<1x256xf32> to vector<4x256xf32>
    %491 = arith.mulf %489, %490 : vector<4x256xf32>
    %c0_99 = arith.constant 0 : index
    %c0_100 = arith.constant 0 : index
    %c0_101 = arith.constant 0 : index
    %492 = vector.load %arg4[%c0_99, %c0_100, %c0_101] : memref<1x4x256xf32, #tpu.memory_space<vmem>>, vector<1x4x256xf32>
    %493 = vector.shape_cast %492 : vector<1x4x256xf32> to vector<4x256xf32>
    %494 = vector.shape_cast %491 : vector<4x256xf32> to vector<1x4x256xf32>
    tpu.vector_store %arg4[%c0_99, %c0_100, %c0_101], %494 {strides = array<i32>} : memref<1x4x256xf32, #tpu.memory_space<vmem>>, vector<1x4x256xf32>,
    return
  }
  func.func @transform_0(%arg0: i32) -> (i32, i32, i32) {
    %c0_i32 = arith.constant 0 : i32
    %c0_i32_0 = arith.constant 0 : i32
    %c0_i32_1 = arith.constant 0 : i32
    return %arg0, %c0_i32, %c0_i32_0 : i32, i32, i32
  }
  func.func @transform_1(%arg0: i32) -> i32 {
    %c0_i32 = arith.constant 0 : i32
    %c0_i32_0 = arith.constant 0 : i32
    return %c0_i32 : i32
  }
  func.func @transform_2(%arg0: i32) -> i32 {
    %c0_i32 = arith.constant 0 : i32
    %c0_i32_0 = arith.constant 0 : i32
    return %c0_i32 : i32
  }
  func.func @transform_3(%arg0: i32) -> (i32, i32, i32) {
    %c0_i32 = arith.constant 0 : i32
    %c0_i32_0 = arith.constant 0 : i32
    %c0_i32_1 = arith.constant 0 : i32
    return %arg0, %c0_i32, %c0_i32_0 : i32, i32, i32
  }
}

</mosaic_0001>

<llo_original>
// kernel: tpu_custom_call.1
$region0: #{tpu_custom_call.1}
  #allocation0 [shape = 'u32[]', space=smem, size = 0x4, offset = 0x4, fixed_abs, tag = 'smem constant byte address 0x4 - core index']
  #allocation1 [shape = 'u32[144,128]{1,0:T(1,128)}', space=vmem, size = 0x12000, scoped, tag = 'internal scratch']
  #allocation2 [shape = 'f32[2,512]{1,0:T(2,128)}', space=vmem, size = 0x1000, scoped, tag = 'scratch operand']
  %s0 = inlined_call_operand.hbm [shape: f32[2,4,256], index: 0, kind: input, shape index: {}]
  %s1 = inlined_call_operand.vmem [shape: f32[98], index: 1, kind: input, shape index: {}]
  %s2 = inlined_call_operand.vmem [shape: f32[2], index: 2, kind: input, shape index: {}]
  %s3 = inlined_call_operand.hbm [shape: f32[2,4,256], index: 3, kind: output, shape index: {}]
  %s4 = sld [smem:[#allocation0]]
  $region57: #{tpu_custom_call.1} parent=0
    _
  %s6 = ssub.s32 1, %s4
  %s7 = scalar_select 0, %s6, %s4
  $region1: #{tpu_custom_call.1} parent=0
    #allocation3 [shape = 'u8[8192]{0}', space=vmem, size = 0x2000, scoped, tag = 'input window, operand 0']
    #allocation4 [shape = 's32[2]{0}', space=sflag, size = 0x8, scoped, tag = 'scoped memory for tpu_custom_call.1']
    #allocation5 [shape = 's32[2]{0}', space=sflag, size = 0x8, scoped, tag = 'scoped memory for tpu_custom_call.1']
    #allocation6 [shape = 's32[2]{0}', space=sflag, size = 0x8, scoped, tag = 'scoped memory for tpu_custom_call.1']
    #allocation7 [shape = 'u8[512]{0}', space=smem, size = 0x200, scoped, tag = 'input window, operand 1, single buffered']
    #allocation8 [shape = 'u8[512]{0}', space=smem, size = 0x200, scoped, tag = 'input window, operand 2, single buffered']
    #allocation9 [shape = 's32[1]{0}', space=sflag, size = 0x4, scoped, tag = 'scoped memory for tpu_custom_call.1']
    #allocation10 [shape = 'u8[8192]{0}', space=vmem, size = 0x2000, scoped, tag = 'output window, operand 0']
    %8 = vsyncpa [#allocation4], 0
    %s9 = scalar_lea.sflag [#allocation4], 1
    %10 = vsyncpa %s9, 0
    %11 = vsyncpa [#allocation6], 0
    %12 = vsyncpa [#allocation9], 0
    %13 = vsyncpa [#allocation5], 0
    %s14 = scalar_lea.sflag [#allocation5], 1
    %15 = vsyncpa %s14, 0
    loop: start=0, step=1, limit=4
    $region2: #{tpu_custom_call.1} parent=1 // loop_pre_header
      _
    $region3: #{tpu_custom_call.1} parent=1 // loop_header
      %s17 = sphi 0, %s21
      %p18 = scmp.ge.s32.totalorder %s17, 4
      %s27 = sphi 0, %s29
      %s30 = sphi 0, %s27
      %s31 = sphi 0, %s30
      %s47 = sphi 0, %s31
      %s51 = sphi 0, %s51
      %s53 = sphi 0, %s51
      %s54 = sphi 0, %s53
      %s68 = sphi 0, %s54
      %s72 = sphi 0, %s72
      %s74 = sphi 0, %s72
      %s75 = sphi 0, %s74
      %s89 = sphi 0, %s75
      %s95 = sphi 0, %s97
      %s98 = sphi 0, %s95
      %s99 = sphi 0, %s98
      %s115 = sphi 0, %s99
    $region4: #{tpu_custom_call.1} parent=1 // loop_header_branch
      %20 = sbr.rel (%p18) target = $region8
    $region5: #{tpu_custom_call.1} parent=1 // loop_body
      %s22 = ssub.s32 %s17, 1
      %s23 = ssub.s32 %s17, 2
      %s24 = sadd.s32 %s17, 1
      %s25 = ssub.s32 %s17, %s24
      %p26 = scmp.eq.s32.totalorder %s25, 0
      %s28 = sadd.s32 %s27, 1
      %s29 = scalar_select %p26, %s27, %s28
      %p32 = pneg %p26
      %p33 = scmp.eq.s32.totalorder %s17, 1
      %p34 = por %p32, %p33
      %p35 = scmp.ne.s32.totalorder %s27, %s30
      %p36 = scmp.eq.s32.totalorder %s17, 0
      %p37 = por %p35, %p36
      %p38 = scmp.ne.s32.totalorder %s27, %s30
      %p39 = scmp.eq.s32.totalorder %s22, 1
      %p40 = por %p38, %p39
      %p41 = scmp.ne.s32.totalorder %s30, %s31
      %p42 = scmp.eq.s32.totalorder %s22, 0
      %p43 = por %p41, %p42
      %p44 = scmp.ne.s32.totalorder %s30, %s31
      %p45 = scmp.eq.s32.totalorder %s23, 1
      %p46 = por %p44, %p45
      %p48 = scmp.ne.s32.totalorder %s31, %s47
      %p49 = scmp.eq.s32.totalorder %s23, 0
      %p50 = por %p48, %p49
      %s52 = sadd.s32 %s51, 1
      %p55 = scmp.eq.s32.totalorder %s17, 1
      %p56 = scmp.ne.s32.totalorder %s51, %s53
      %p57 = scmp.eq.s32.totalorder %s17, 0
      %p58 = por %p56, %p57
      %p59 = scmp.ne.s32.totalorder %s51, %s53
      %p60 = scmp.eq.s32.totalorder %s22, 1
      %p61 = por %p59, %p60
      %p62 = scmp.ne.s32.totalorder %s53, %s54
      %p63 = scmp.eq.s32.totalorder %s22, 0
      %p64 = por %p62, %p63
      %p65 = scmp.ne.s32.totalorder %s53, %s54
      %p66 = scmp.eq.s32.totalorder %s23, 1
      %p67 = por %p65, %p66
      %p69 = scmp.ne.s32.totalorder %s54, %s68
      %p70 = scmp.eq.s32.totalorder %s23, 0
      %p71 = por %p69, %p70
      %s73 = sadd.s32 %s72, 1
      %p76 = scmp.eq.s32.totalorder %s17, 1
      %p77 = scmp.ne.s32.totalorder %s72, %s74
      %p78 = scmp.eq.s32.totalorder %s17, 0
      %p79 = por %p77, %p78
      %p80 = scmp.ne.s32.totalorder %s72, %s74
      %p81 = scmp.eq.s32.totalorder %s22, 1
      %p82 = por %p80, %p81
      %p83 = scmp.ne.s32.totalorder %s74, %s75
      %p84 = scmp.eq.s32.totalorder %s22, 0
      %p85 = por %p83, %p84
      %p86 = scmp.ne.s32.totalorder %s74, %s75
      %p87 = scmp.eq.s32.totalorder %s23, 1
      %p88 = por %p86, %p87
      %p90 = scmp.ne.s32.totalorder %s75, %s89
      %p91 = scmp.eq.s32.totalorder %s23, 0
      %p92 = por %p90, %p91
      %s93 = ssub.s32 %s17, %s24
      %p94 = scmp.eq.s32.totalorder %s93, 0
      %s96 = sadd.s32 %s95, 1
      %s97 = scalar_select %p94, %s95, %s96
      %p100 = pneg %p94
      %p101 = scmp.eq.s32.totalorder %s17, 1
      %p102 = por %p100, %p101
      %p103 = scmp.ne.s32.totalorder %s95, %s98
      %p104 = scmp.eq.s32.totalorder %s17, 0
      %p105 = por %p103, %p104
      %p106 = scmp.ne.s32.totalorder %s95, %s98
      %p107 = scmp.eq.s32.totalorder %s22, 1
      %p108 = por %p106, %p107
      %p109 = scmp.ne.s32.totalorder %s98, %s99
      %p110 = scmp.eq.s32.totalorder %s22, 0
      %p111 = por %p109, %p110
      %p112 = scmp.ne.s32.totalorder %s98, %s99
      %p113 = scmp.eq.s32.totalorder %s23, 1
      %p114 = por %p112, %p113
      %p116 = scmp.ne.s32.totalorder %s99, %s115
      %p117 = scmp.eq.s32.totalorder %s23, 0
      %p118 = por %p116, %p117
      %p119 = scmp.le.s32.totalorder 1, %s17
      %p120 = scmp.lt.s32.totalorder %s17, 3
      %p121 = pnand %p119, %p120
      %p122 = pneg %p121
      // Predicated region
      $region9: #{tpu_custom_call.1} parent=5 // pred_check
        _
      $region10: #{tpu_custom_call.1} parent=5 // pred_check_branch
        %124 = sbr.rel (%p121) target = $region12
      $region11: #{tpu_custom_call.1} parent=5 // pred_region
        %s125 = ssub.s32 %s17, 1
        // Predicated region
        $region13: #{tpu_custom_call.1} parent=11 // pred_check
          %p126 = pneg %p64
        $region14: #{tpu_custom_call.1} parent=11 // pred_check_branch
          %128 = sbr.rel (%p126) target = $region16
        $region15: #{tpu_custom_call.1} parent=11 // pred_region
          %s130 = ssub.s32 16, 16
          %131 = vsyncadd [#allocation6], %s130
          %s133 = sshll.u32 %s1, 4
          %s134 = int_to_ptr.vmem [resolvable:$true] %s133
          %136 = dma.vmem_to_smem %s134, 16, [#allocation7], [#allocation6]
        $region16: #{tpu_custom_call.1} parent=11 // pred_fallthru
          _
        // Predicated region
        $region17: #{tpu_custom_call.1} parent=11 // pred_check
          %p137 = pneg %p85
        $region18: #{tpu_custom_call.1} parent=11 // pred_check_branch
          %139 = sbr.rel (%p137) target = $region20
        $region19: #{tpu_custom_call.1} parent=11 // pred_region
          %s141 = ssub.s32 16, 16
          %142 = vsyncadd [#allocation9], %s141
          %s144 = sshll.u32 %s2, 4
          %s145 = int_to_ptr.vmem [resolvable:$true] %s144
          %147 = dma.vmem_to_smem %s145, 16, [#allocation8], [#allocation9]
        $region20: #{tpu_custom_call.1} parent=11 // pred_fallthru
          _
      $region12: #{tpu_custom_call.1} parent=5 // pred_fallthru
        _
      %p148 = scmp.lt.s32.totalorder %s17, 2
      // Predicated region
      $region21: #{tpu_custom_call.1} parent=5 // pred_check
        %p149 = pneg %p148
      $region22: #{tpu_custom_call.1} parent=5 // pred_check_branch
        %151 = sbr.rel (%p149) target = $region24
      $region23: #{tpu_custom_call.1} parent=5 // pred_region
        // Predicated region
        $region25: #{tpu_custom_call.1} parent=23 // pred_check
          %p152 = pneg %p37
        $region26: #{tpu_custom_call.1} parent=23 // pred_check_branch
          %154 = sbr.rel (%p152) target = $region28
        $region27: #{tpu_custom_call.1} parent=23 // pred_region
          %s155 = sand.u32 %s27, 1
          %s156 = scalar_lea.sflag [#allocation4], %s155
          %s157 = sand.u32 %s27, 1
          %s158 = smul.addr %s157, 8
          %s159 = scalar_lea.vmem [#allocation3], %s158
          %s161 = ssub.s32 128, 128
          %162 = vsyncadd %s156, %s161
          %s163 = smul.addr %s17, 2
          %s164 = smul.addr %s163, 64
          %s165 = scalar_lea.hbm %s0, %s164
          %s167 = sshll.u32 %s159, 4
          %s168 = int_to_ptr.vmem [resolvable:$true] %s167
          %170 = dma.hbm_to_vmem [thread:$0]  %s165, 128, %s168, %s156
        $region28: #{tpu_custom_call.1} parent=23 // pred_fallthru
          _
      $region24: #{tpu_custom_call.1} parent=5 // pred_fallthru
        _
      %p171 = scmp.le.s32.totalorder 1, %s17
      %p172 = scmp.lt.s32.totalorder %s17, 3
      %p173 = pnand %p171, %p172
      %p174 = pneg %p173
      // Predicated region
      $region29: #{tpu_custom_call.1} parent=5 // pred_check
        _
      $region30: #{tpu_custom_call.1} parent=5 // pred_check_branch
        %176 = sbr.rel (%p173) target = $region32
      $region31: #{tpu_custom_call.1} parent=5 // pred_region
        %s177 = ssub.s32 %s17, 1
        %s178 = sand.u32 %s30, 1
        %s179 = scalar_lea.sflag [#allocation4], %s178
        %s180 = sand.u32 %s30, 1
        %s181 = smul.addr %s180, 8
        %s182 = scalar_lea.vmem [#allocation3], %s181
        // Predicated region
        $region33: #{tpu_custom_call.1} parent=31 // pred_check
          %p183 = pneg %p43
        $region34: #{tpu_custom_call.1} parent=31 // pred_check_branch
          %185 = sbr.rel (%p183) target = $region36
        $region35: #{tpu_custom_call.1} parent=31 // pred_region
          %186 = dma.done %s179, 128
        $region36: #{tpu_custom_call.1} parent=31 // pred_fallthru
          _
        // Predicated region
        $region37: #{tpu_custom_call.1} parent=31 // pred_check
          %p187 = pneg %p64
        $region38: #{tpu_custom_call.1} parent=31 // pred_check_branch
          %189 = sbr.rel (%p187) target = $region40
        $region39: #{tpu_custom_call.1} parent=31 // pred_region
          %190 = dma.done [#allocation6], 16
        $region40: #{tpu_custom_call.1} parent=31 // pred_fallthru
          _
        // Predicated region
        $region41: #{tpu_custom_call.1} parent=31 // pred_check
          %p191 = pneg %p85
        $region42: #{tpu_custom_call.1} parent=31 // pred_check_branch
          %193 = sbr.rel (%p191) target = $region44
        $region43: #{tpu_custom_call.1} parent=31 // pred_region
          %194 = dma.done [#allocation9], 16
        $region44: #{tpu_custom_call.1} parent=31 // pred_fallthru
          _
        %195 = sfence
        %s196 = sand.u32 %s30, 1
        %s197 = scalar_lea.sflag [#allocation4], %s196
        %s198 = sand.u32 %s30, 1
        %s199 = smul.addr %s198, 8
        %s200 = scalar_lea.vmem [#allocation3], %s199
        %p201 = pneg %p43
        %p202 = pneg %p40
        %p203 = pneg %p64
        %p204 = pneg %p61
        %p205 = pneg %p85
        %p206 = pneg %p82
        %p207 = pneg %p111
        %p208 = pneg %p108
        %s209 = sand.u32 %s98, 1
        %s210 = scalar_lea.sflag [#allocation5], %s209
        %s211 = sand.u32 %s98, 1
        %s212 = smul.addr %s211, 8
        %s213 = scalar_lea.vmem [#allocation10], %s212
        %s214 = sld [smem:[#allocation8]]
        %s215 = sld [smem:[#allocation8 + $0x1]]
        %v216 = vlaneseq
        %v217 = vand.u32 %v216, 127
        %v218 = vadd.s32 %v217, 128
        %vm219 = vcmp.lt.s32.totalorder %v217, 0
        %v220 = vsub.s32 0, %v217
        %v221 = vsel %vm219, %v220, %v217
        %v222 = vshrl.u32 %v221, 4
        %v223 = vand.u32 %v221, 15
        %v224 = vsub.s32 0, %v223
        %v225 = vsel %vm219, %v224, %v223
        %vm226 = vcmp.lt.s32.totalorder %v218, 0
        %v227 = vsub.s32 0, %v218
        %v228 = vsel %vm226, %v227, %v218
        %v229 = vshrl.u32 %v228, 4
        %v230 = vand.u32 %v228, 15
        %v231 = vsub.s32 0, %v230
        %v232 = vsel %vm226, %v231, %v230
        %vm233 = vcmp.ne.s32.totalorder %v225, 0
        %vm234 = vcmp.ne.s32.totalorder %v232, 0
        %vm235 = vcmp.lt.s32.totalorder %v225, 0
        %vm236 = vcmp.lt.s32.totalorder %v232, 0
        %vm237 = vmand %vm235, %vm233
        %vm238 = vmand %vm236, %vm234
        %v239 = vadd.s32 %v225, 16
        %v240 = vadd.s32 %v232, 16
        %v241 = vsel %vm237, %v239, %v225
        %v242 = vsel %vm238, %v240, %v232
        %vm243 = vcmp.ge.s32.totalorder %v241, 3
        %vm244 = vcmp.ge.s32.totalorder %v242, 3
        %vm245 = vcmp.ge.s32.totalorder %v241, 2
        %vm246 = vcmp.ge.s32.totalorder %v242, 2
        %vm247 = vcmp.ge.s32.totalorder %v241, 1
        %vm248 = vcmp.ge.s32.totalorder %v242, 1
        %vm249 = vcmp.lt.s32.totalorder %v241, 15
        %vm250 = vcmp.lt.s32.totalorder %v242, 15
        %vm251 = vcmp.lt.s32.totalorder %v241, 14
        %vm252 = vcmp.lt.s32.totalorder %v242, 14
        %vm253 = vcmp.lt.s32.totalorder %v241, 13
        %vm254 = vcmp.lt.s32.totalorder %v242, 13
        %v255 = vlaneseq
        %v256 = vshrl.u32 %v255, 7
        %vm257 = vcmp.eq.s32.totalorder %v256, 0
        %258 = vst [vmem:[#allocation2] sm:$0xff] 0.0
        %v259 = vld [vmem:[%s182] sm:$0xff]
        %v261 = vcombine.high %v259, %v259
        %vm263 = vcmask 1043456
        %v264 = vsel %vm263, %v259, -inf
        %v265 = vrot.slane %v264, 4
        %v266 = vmax.f32 %v264, %v265
        %v267 = vrot.slane %v266, 2
        %v268 = vmax.f32 %v266, %v267
        %v269 = vrot.slane %v268, 1
        %v270 = vmax.f32 %v268, %v269
        %v271 = vsel %vm263, %v261, -inf
        %v272 = vrot.slane %v271, 4
        %v273 = vmax.f32 %v271, %v272
        %v274 = vrot.slane %v273, 2
        %v275 = vmax.f32 %v273, %v274
        %v276 = vrot.slane %v275, 1
        %v277 = vmax.f32 %v275, %v276
        %v278 = vsel %vm263, %v259, 0.0
        %v279 = vrot.slane %v278, 4
        %v280 = vadd.f32 %v278, %v279
        %v281 = vrot.slane %v280, 2
        %v282 = vadd.f32 %v280, %v281
        %v283 = vrot.slane %v282, 1
        %v284 = vadd.f32 %v282, %v283
        %v285 = vsel %vm263, %v261, 0.0
        %v286 = vrot.slane %v285, 4
        %v287 = vadd.f32 %v285, %v286
        %v288 = vrot.slane %v287, 2
        %v289 = vadd.f32 %v287, %v288
        %v290 = vrot.slane %v289, 1
        %v291 = vadd.f32 %v289, %v290
        %v292 = vmul.f32 %v284, 0.25
        %v293 = vmul.f32 %v291, 0.25
        %v296 = vcombine.low %v270, %v277
        %v298 = vunpack.c.l.s4 1966171168
        %v299 = vunpack.c.0.s8 %v298
        %v300 = vlaneseq
        %v301 = vshrl.u32 %v300, 7
        %v302 = vsub.s32 %v299, %v301
        %v303 = vrot.slane %v296, %v302
        %v305 = vunpack.c.l.s4 1966171168
        %v306 = vunpack.c.0.s8 %v305
        %v307 = vlaneseq
        %v308 = vshrl.u32 %v307, 7
        %v309 = vsub.s32 %v306, %v308
        %v310 = vrot.slane %v303, %v309
        %v312 = vlaneseq
        %vm313 = vcmp.ge.s32.totalorder %v312, 0
        %vm314 = vcmp.lt.s32.totalorder %v312, 256
        %vm315 = vmand %vm313, %vm314
        %s316 = scalar_lea.vmem [#allocation2], 2
        %317 = vst.msk [vmem:[%s316] ss:$2 sm:$0x3] %vm315, %v310
        %v320 = vcombine.low %v292, %v293
        %v322 = vunpack.c.l.s4 1966171168
        %v323 = vunpack.c.0.s8 %v322
        %v324 = vlaneseq
        %v325 = vshrl.u32 %v324, 7
        %v326 = vsub.s32 %v323, %v325
        %v327 = vrot.slane %v320, %v326
        %v329 = vunpack.c.l.s4 1966171168
        %v330 = vunpack.c.0.s8 %v329
        %v331 = vlaneseq
        %v332 = vshrl.u32 %v331, 7
        %v333 = vsub.s32 %v330, %v332
        %v334 = vrot.slane %v327, %v333
        %s336 = scalar_lea.vmem [#allocation2], 3
        %337 = vst.msk [vmem:[%s336] ss:$2 sm:$0x3] %vm315, %v334
        %v338 = vld [vmem:[#allocation2] sm:$0x3f]
        %s339 = sld [smem:[#allocation7]]
        %s340 = sld [smem:[#allocation7 + $0x31]]
        %v341 = vstv %s339
        %v342 = vstv %s340
        %v343 = vsel %vm257, %v341, %v342
        %v345 = vcombine.high %v338, %v338
        %v347 = vunpack.c.l.s4 1983009808
        %v348 = vunpack.c.0.s8 %v347
        %v349 = vlaneseq
        %v350 = vshrl.u32 %v349, 7
        %v351 = vsub.s32 %v348, %v350
        %v352 = vrot.slane %v338, %v351
        %v354 = vunpack.c.l.s4 1983009808
        %v355 = vunpack.c.0.s8 %v354
        %v356 = vlaneseq
        %v357 = vshrl.u32 %v356, 7
        %v358 = vsub.s32 %v355, %v357
        %v359 = vrot.slane %v345, %v358
        %v360 = vcombine.high %v352, %v352
        %361 = vrot.lane.b32.xlu0 %v352, 51
        %v362 = vpop.permute.xlu0 %361
        %363 = vrot.lane.b32.xlu0 %v360, 51
        %v364 = vpop.permute.xlu0 %363
        %365 = vrot.lane.b32.xlu0 %v359, 51
        %v366 = vpop.permute.xlu0 %365
        %vm367 = vcmask 416768
        %v368 = vsel %vm367, %v362, %v364
        %v369 = vsel %vm367, %v364, %v366
        %v372 = vmul.f32 %v343, %v368
        %v373 = vmul.f32 %v343, %v369
        %v374 = vadd.f32 %v372, 0.0
        %v375 = vadd.f32 %v373, 0.0
        %v376 = vld [vmem:[#allocation2] sm:$0x3f]
        %s377 = sld [smem:[#allocation7 + $0x7]]
        %s378 = sld [smem:[#allocation7 + $0x38]]
        %v379 = vstv %s377
        %v380 = vstv %s378
        %v381 = vsel %vm257, %v379, %v380
        %v383 = vcombine.high %v376, %v376
        %v385 = vunpack.c.l.s4 1983009808
        %v386 = vunpack.c.0.s8 %v385
        %v387 = vlaneseq
        %v388 = vshrl.u32 %v387, 7
        %v389 = vsub.s32 %v386, %v388
        %v390 = vrot.slane %v376, %v389
        %v392 = vunpack.c.l.s4 1983009808
        %v393 = vunpack.c.0.s8 %v392
        %v394 = vlaneseq
        %v395 = vshrl.u32 %v394, 7
        %v396 = vsub.s32 %v393, %v395
        %v397 = vrot.slane %v383, %v396
        %v398 = vcombine.high %v390, %v390
        %399 = vrot.lane.b32.xlu0 %v390, 35
        %v400 = vpop.permute.xlu0 %399
        %401 = vrot.lane.b32.xlu0 %v398, 35
        %v402 = vpop.permute.xlu0 %401
        %403 = vrot.lane.b32.xlu0 %v397, 35
        %v404 = vpop.permute.xlu0 %403
        %vm405 = vcmask 285696
        %v406 = vsel %vm405, %v400, %v402
        %v407 = vsel %vm405, %v402, %v404
        %v410 = vmul.f32 %v381, %v406
        %v411 = vmul.f32 %v381, %v407
        %v412 = vadd.f32 %v374, %v410
        %v413 = vadd.f32 %v375, %v411
        %v414 = vld [vmem:[#allocation2] sm:$0x3f]
        %s415 = sld [smem:[#allocation7 + $0xe]]
        %s416 = sld [smem:[#allocation7 + $0x3f]]
        %v417 = vstv %s415
        %v418 = vstv %s416
        %v419 = vsel %vm257, %v417, %v418
        %v421 = vcombine.high %v414, %v414
        %v423 = vunpack.c.l.s4 1983009808
        %v424 = vunpack.c.0.s8 %v423
        %v425 = vlaneseq
        %v426 = vshrl.u32 %v425, 7
        %v427 = vsub.s32 %v424, %v426
        %v428 = vrot.slane %v414, %v427
        %v430 = vunpack.c.l.s4 1983009808
        %v431 = vunpack.c.0.s8 %v430
        %v432 = vlaneseq
        %v433 = vshrl.u32 %v432, 7
        %v434 = vsub.s32 %v431, %v433
        %v435 = vrot.slane %v421, %v434
        %v436 = vcombine.high %v428, %v428
        %437 = vrot.lane.b32.xlu0 %v428, 19
        %v438 = vpop.permute.xlu0 %437
        %439 = vrot.lane.b32.xlu0 %v436, 19
        %v440 = vpop.permute.xlu0 %439
        %441 = vrot.lane.b32.xlu0 %v435, 19
        %v442 = vpop.permute.xlu0 %441
        %vm443 = vcmask 154624
        %v444 = vsel %vm443, %v438, %v440
        %v445 = vsel %vm443, %v440, %v442
        %v448 = vmul.f32 %v419, %v444
        %v449 = vmul.f32 %v419, %v445
        %v450 = vadd.f32 %v412, %v448
        %v451 = vadd.f32 %v413, %v449
        %v452 = vld [vmem:[#allocation2] sm:$0x3f]
        %s453 = sld [smem:[#allocation7 + $0x15]]
        %s454 = sld [smem:[#allocation7 + $0x46]]
        %v455 = vstv %s453
        %v456 = vstv %s454
        %v457 = vsel %vm257, %v455, %v456
        %v459 = vcombine.high %v452, %v452
        %v461 = vunpack.c.l.s4 1983009808
        %v462 = vunpack.c.0.s8 %v461
        %v463 = vlaneseq
        %v464 = vshrl.u32 %v463, 7
        %v465 = vsub.s32 %v462, %v464
        %v466 = vrot.slane %v452, %v465
        %v468 = vunpack.c.l.s4 1983009808
        %v469 = vunpack.c.0.s8 %v468
        %v470 = vlaneseq
        %v471 = vshrl.u32 %v470, 7
        %v472 = vsub.s32 %v469, %v471
        %v473 = vrot.slane %v459, %v472
        %v474 = vcombine.high %v466, %v466
        %475 = vrot.lane.b32.xlu0 %v466, 3
        %v476 = vpop.permute.xlu0 %475
        %477 = vrot.lane.b32.xlu0 %v474, 3
        %v478 = vpop.permute.xlu0 %477
        %479 = vrot.lane.b32.xlu0 %v473, 3
        %v480 = vpop.permute.xlu0 %479
        %vm481 = vcmask 23552
        %v482 = vsel %vm481, %v476, %v478
        %v483 = vsel %vm481, %v478, %v480
        %v486 = vmul.f32 %v457, %v482
        %v487 = vmul.f32 %v457, %v483
        %v488 = vadd.f32 %v450, %v486
        %v489 = vadd.f32 %v451, %v487
        %v490 = vld [vmem:[#allocation2 + $0x2] sm:$0x3f]
        %s491 = sld [smem:[#allocation7 + $0x1c]]
        %s492 = sld [smem:[#allocation7 + $0x4d]]
        %v493 = vstv %s491
        %v494 = vstv %s492
        %v495 = vsel %vm257, %v493, %v494
        %v497 = vcombine.high %v490, %v490
        %v499 = vunpack.c.l.s4 1983009808
        %v500 = vunpack.c.0.s8 %v499
        %v501 = vlaneseq
        %v502 = vshrl.u32 %v501, 7
        %v503 = vsub.s32 %v500, %v502
        %v504 = vrot.slane %v490, %v503
        %v506 = vunpack.c.l.s4 1983009808
        %v507 = vunpack.c.0.s8 %v506
        %v508 = vlaneseq
        %v509 = vshrl.u32 %v508, 7
        %v510 = vsub.s32 %v507, %v509
        %v511 = vrot.slane %v497, %v510
        %v512 = vcombine.high %v504, %v504
        %513 = vrot.lane.b32.xlu0 %v504, 115
        %v514 = vpop.permute.xlu0 %513
        %515 = vrot.lane.b32.xlu0 %v512, 115
        %v516 = vpop.permute.xlu0 %515
        %517 = vrot.lane.b32.xlu0 %v511, 115
        %v518 = vpop.permute.xlu0 %517
        %vm519 = vcmask 941056
        %v520 = vsel %vm519, %v514, %v516
        %v521 = vsel %vm519, %v516, %v518
        %v524 = vmul.f32 %v495, %v520
        %v525 = vmul.f32 %v495, %v521
        %v526 = vadd.f32 %v488, %v524
        %v527 = vadd.f32 %v489, %v525
        %v528 = vld [vmem:[#allocation2 + $0x2] sm:$0x3f]
        %s529 = sld [smem:[#allocation7 + $0x23]]
        %s530 = sld [smem:[#allocation7 + $0x54]]
        %v531 = vstv %s529
        %v532 = vstv %s530
        %v533 = vsel %vm257, %v531, %v532
        %v535 = vcombine.high %v528, %v528
        %v537 = vunpack.c.l.s4 1983009808
        %v538 = vunpack.c.0.s8 %v537
        %v539 = vlaneseq
        %v540 = vshrl.u32 %v539, 7
        %v541 = vsub.s32 %v538, %v540
        %v542 = vrot.slane %v528, %v541
        %v544 = vunpack.c.l.s4 1983009808
        %v545 = vunpack.c.0.s8 %v544
        %v546 = vlaneseq
        %v547 = vshrl.u32 %v546, 7
        %v548 = vsub.s32 %v545, %v547
        %v549 = vrot.slane %v535, %v548
        %v550 = vcombine.high %v542, %v542
        %551 = vrot.lane.b32.xlu0 %v542, 99
        %v552 = vpop.permute.xlu0 %551
        %553 = vrot.lane.b32.xlu0 %v550, 99
        %v554 = vpop.permute.xlu0 %553
        %555 = vrot.lane.b32.xlu0 %v549, 99
        %v556 = vpop.permute.xlu0 %555
        %vm557 = vcmask 809984
        %v558 = vsel %vm557, %v552, %v554
        %v559 = vsel %vm557, %v554, %v556
        %v562 = vmul.f32 %v533, %v558
        %v563 = vmul.f32 %v533, %v559
        %v564 = vadd.f32 %v526, %v562
        %v565 = vadd.f32 %v527, %v563
        %v566 = vld [vmem:[#allocation2 + $0x2] sm:$0x3f]
        %s567 = sld [smem:[#allocation7 + $0x2a]]
        %s568 = sld [smem:[#allocation7 + $0x5b]]
        %v569 = vstv %s567
        %v570 = vstv %s568
        %v571 = vsel %vm257, %v569, %v570
        %v573 = vcombine.high %v566, %v566
        %v575 = vunpack.c.l.s4 1983009808
        %v576 = vunpack.c.0.s8 %v575
        %v577 = vlaneseq
        %v578 = vshrl.u32 %v577, 7
        %v579 = vsub.s32 %v576, %v578
        %v580 = vrot.slane %v566, %v579
        %v582 = vunpack.c.l.s4 1983009808
        %v583 = vunpack.c.0.s8 %v582
        %v584 = vlaneseq
        %v585 = vshrl.u32 %v584, 7
        %v586 = vsub.s32 %v583, %v585
        %v587 = vrot.slane %v573, %v586
        %v588 = vcombine.high %v580, %v580
        %589 = vrot.lane.b32.xlu0 %v580, 83
        %v590 = vpop.permute.xlu0 %589
        %591 = vrot.lane.b32.xlu0 %v588, 83
        %v592 = vpop.permute.xlu0 %591
        %593 = vrot.lane.b32.xlu0 %v587, 83
        %v594 = vpop.permute.xlu0 %593
        %vm595 = vcmask 678912
        %v596 = vsel %vm595, %v590, %v592
        %v597 = vsel %vm595, %v592, %v594
        %v600 = vmul.f32 %v571, %v596
        %v601 = vmul.f32 %v571, %v597
        %v602 = vadd.f32 %v564, %v600
        %v603 = vadd.f32 %v565, %v601
        %v604 = vsel %vm243, 1, 0
        %v605 = vsel %vm244, 1, 0
        %vm606 = vcmp.eq.s32.totalorder %v604, 1
        %vm607 = vcmp.eq.s32.totalorder %v605, 1
        %v608 = vsel %vm606, %v602, 0.0
        %v609 = vsel %vm607, %v603, 0.0
        %v610 = vadd.f32 %v608, 0.0
        %v611 = vadd.f32 %v609, 0.0
        %v612 = vld [vmem:[#allocation2] sm:$0x3f]
        %s613 = sld [smem:[#allocation7 + $0x1]]
        %s614 = sld [smem:[#allocation7 + $0x32]]
        %v615 = vstv %s613
        %v616 = vstv %s614
        %v617 = vsel %vm257, %v615, %v616
        %v619 = vcombine.high %v612, %v612
        %v621 = vunpack.c.l.s4 1983009808
        %v622 = vunpack.c.0.s8 %v621
        %v623 = vlaneseq
        %v624 = vshrl.u32 %v623, 7
        %v625 = vsub.s32 %v622, %v624
        %v626 = vrot.slane %v612, %v625
        %v628 = vunpack.c.l.s4 1983009808
        %v629 = vunpack.c.0.s8 %v628
        %v630 = vlaneseq
        %v631 = vshrl.u32 %v630, 7
        %v632 = vsub.s32 %v629, %v631
        %v633 = vrot.slane %v619, %v632
        %v634 = vcombine.high %v626, %v626
        %635 = vrot.lane.b32.xlu0 %v626, 50
        %v636 = vpop.permute.xlu0 %635
        %637 = vrot.lane.b32.xlu0 %v634, 50
        %v638 = vpop.permute.xlu0 %637
        %639 = vrot.lane.b32.xlu0 %v633, 50
        %v640 = vpop.permute.xlu0 %639
        %vm641 = vcmask 408576
        %v642 = vsel %vm641, %v636, %v638
        %v643 = vsel %vm641, %v638, %v640
        %v646 = vmul.f32 %v617, %v642
        %v647 = vmul.f32 %v617, %v643
        %v648 = vadd.f32 %v646, 0.0
        %v649 = vadd.f32 %v647, 0.0
        %v650 = vld [vmem:[#allocation2] sm:$0x3f]
        %s651 = sld [smem:[#allocation7 + $0x8]]
        %s652 = sld [smem:[#allocation7 + $0x39]]
        %v653 = vstv %s651
        %v654 = vstv %s652
        %v655 = vsel %vm257, %v653, %v654
        %v657 = vcombine.high %v650, %v650
        %v659 = vunpack.c.l.s4 1983009808
        %v660 = vunpack.c.0.s8 %v659
        %v661 = vlaneseq
        %v662 = vshrl.u32 %v661, 7
        %v663 = vsub.s32 %v660, %v662
        %v664 = vrot.slane %v650, %v663
        %v666 = vunpack.c.l.s4 1983009808
        %v667 = vunpack.c.0.s8 %v666
        %v668 = vlaneseq
        %v669 = vshrl.u32 %v668, 7
        %v670 = vsub.s32 %v667, %v669
        %v671 = vrot.slane %v657, %v670
        %v672 = vcombine.high %v664, %v664
        %673 = vrot.lane.b32.xlu0 %v664, 34
        %v674 = vpop.permute.xlu0 %673
        %675 = vrot.lane.b32.xlu0 %v672, 34
        %v676 = vpop.permute.xlu0 %675
        %677 = vrot.lane.b32.xlu0 %v671, 34
        %v678 = vpop.permute.xlu0 %677
        %vm679 = vcmask 277504
        %v680 = vsel %vm679, %v674, %v676
        %v681 = vsel %vm679, %v676, %v678
        %v684 = vmul.f32 %v655, %v680
        %v685 = vmul.f32 %v655, %v681
        %v686 = vadd.f32 %v648, %v684
        %v687 = vadd.f32 %v649, %v685
        %v688 = vld [vmem:[#allocation2] sm:$0x3f]
        %s689 = sld [smem:[#allocation7 + $0xf]]
        %s690 = sld [smem:[#allocation7 + $0x40]]
        %v691 = vstv %s689
        %v692 = vstv %s690
        %v693 = vsel %vm257, %v691, %v692
        %v695 = vcombine.high %v688, %v688
        %v697 = vunpack.c.l.s4 1983009808
        %v698 = vunpack.c.0.s8 %v697
        %v699 = vlaneseq
        %v700 = vshrl.u32 %v699, 7
        %v701 = vsub.s32 %v698, %v700
        %v702 = vrot.slane %v688, %v701
        %v704 = vunpack.c.l.s4 1983009808
        %v705 = vunpack.c.0.s8 %v704
        %v706 = vlaneseq
        %v707 = vshrl.u32 %v706, 7
        %v708 = vsub.s32 %v705, %v707
        %v709 = vrot.slane %v695, %v708
        %v710 = vcombine.high %v702, %v702
        %711 = vrot.lane.b32.xlu0 %v702, 18
        %v712 = vpop.permute.xlu0 %711
        %713 = vrot.lane.b32.xlu0 %v710, 18
        %v714 = vpop.permute.xlu0 %713
        %715 = vrot.lane.b32.xlu0 %v709, 18
        %v716 = vpop.permute.xlu0 %715
        %vm717 = vcmask 146432
        %v718 = vsel %vm717, %v712, %v714
        %v719 = vsel %vm717, %v714, %v716
        %v722 = vmul.f32 %v693, %v718
        %v723 = vmul.f32 %v693, %v719
        %v724 = vadd.f32 %v686, %v722
        %v725 = vadd.f32 %v687, %v723
        %v726 = vld [vmem:[#allocation2] sm:$0x3f]
        %s727 = sld [smem:[#allocation7 + $0x16]]
        %s728 = sld [smem:[#allocation7 + $0x47]]
        %v729 = vstv %s727
        %v730 = vstv %s728
        %v731 = vsel %vm257, %v729, %v730
        %v733 = vcombine.high %v726, %v726
        %v735 = vunpack.c.l.s4 1983009808
        %v736 = vunpack.c.0.s8 %v735
        %v737 = vlaneseq
        %v738 = vshrl.u32 %v737, 7
        %v739 = vsub.s32 %v736, %v738
        %v740 = vrot.slane %v726, %v739
        %v742 = vunpack.c.l.s4 1983009808
        %v743 = vunpack.c.0.s8 %v742
        %v744 = vlaneseq
        %v745 = vshrl.u32 %v744, 7
        %v746 = vsub.s32 %v743, %v745
        %v747 = vrot.slane %v733, %v746
        %v748 = vcombine.high %v740, %v740
        %749 = vrot.lane.b32.xlu0 %v740, 2
        %v750 = vpop.permute.xlu0 %749
        %751 = vrot.lane.b32.xlu0 %v748, 2
        %v752 = vpop.permute.xlu0 %751
        %753 = vrot.lane.b32.xlu0 %v747, 2
        %v754 = vpop.permute.xlu0 %753
        %vm755 = vcmask 15360
        %v756 = vsel %vm755, %v750, %v752
        %v757 = vsel %vm755, %v752, %v754
        %v760 = vmul.f32 %v731, %v756
        %v761 = vmul.f32 %v731, %v757
        %v762 = vadd.f32 %v724, %v760
        %v763 = vadd.f32 %v725, %v761
        %v764 = vld [vmem:[#allocation2 + $0x2] sm:$0x3f]
        %s765 = sld [smem:[#allocation7 + $0x1d]]
        %s766 = sld [smem:[#allocation7 + $0x4e]]
        %v767 = vstv %s765
        %v768 = vstv %s766
        %v769 = vsel %vm257, %v767, %v768
        %v771 = vcombine.high %v764, %v764
        %v773 = vunpack.c.l.s4 1983009808
        %v774 = vunpack.c.0.s8 %v773
        %v775 = vlaneseq
        %v776 = vshrl.u32 %v775, 7
        %v777 = vsub.s32 %v774, %v776
        %v778 = vrot.slane %v764, %v777
        %v780 = vunpack.c.l.s4 1983009808
        %v781 = vunpack.c.0.s8 %v780
        %v782 = vlaneseq
        %v783 = vshrl.u32 %v782, 7
        %v784 = vsub.s32 %v781, %v783
        %v785 = vrot.slane %v771, %v784
        %v786 = vcombine.high %v778, %v778
        %787 = vrot.lane.b32.xlu0 %v778, 114
        %v788 = vpop.permute.xlu0 %787
        %789 = vrot.lane.b32.xlu0 %v786, 114
        %v790 = vpop.permute.xlu0 %789
        %791 = vrot.lane.b32.xlu0 %v785, 114
        %v792 = vpop.permute.xlu0 %791
        %vm793 = vcmask 932864
        %v794 = vsel %vm793, %v788, %v790
        %v795 = vsel %vm793, %v790, %v792
        %v798 = vmul.f32 %v769, %v794
        %v799 = vmul.f32 %v769, %v795
        %v800 = vadd.f32 %v762, %v798
        %v801 = vadd.f32 %v763, %v799
        %v802 = vld [vmem:[#allocation2 + $0x2] sm:$0x3f]
        %s803 = sld [smem:[#allocation7 + $0x24]]
        %s804 = sld [smem:[#allocation7 + $0x55]]
        %v805 = vstv %s803
        %v806 = vstv %s804
        %v807 = vsel %vm257, %v805, %v806
        %v809 = vcombine.high %v802, %v802
        %v811 = vunpack.c.l.s4 1983009808
        %v812 = vunpack.c.0.s8 %v811
        %v813 = vlaneseq
        %v814 = vshrl.u32 %v813, 7
        %v815 = vsub.s32 %v812, %v814
        %v816 = vrot.slane %v802, %v815
        %v818 = vunpack.c.l.s4 1983009808
        %v819 = vunpack.c.0.s8 %v818
        %v820 = vlaneseq
        %v821 = vshrl.u32 %v820, 7
        %v822 = vsub.s32 %v819, %v821
        %v823 = vrot.slane %v809, %v822
        %v824 = vcombine.high %v816, %v816
        %825 = vrot.lane.b32.xlu0 %v816, 98
        %v826 = vpop.permute.xlu0 %825
        %827 = vrot.lane.b32.xlu0 %v824, 98
        %v828 = vpop.permute.xlu0 %827
        %829 = vrot.lane.b32.xlu0 %v823, 98
        %v830 = vpop.permute.xlu0 %829
        %vm831 = vcmask 801792
        %v832 = vsel %vm831, %v826, %v828
        %v833 = vsel %vm831, %v828, %v830
        %v836 = vmul.f32 %v807, %v832
        %v837 = vmul.f32 %v807, %v833
        %v838 = vadd.f32 %v800, %v836
        %v839 = vadd.f32 %v801, %v837
        %v840 = vld [vmem:[#allocation2 + $0x2] sm:$0x3f]
        %s841 = sld [smem:[#allocation7 + $0x2b]]
        %s842 = sld [smem:[#allocation7 + $0x5c]]
        %v843 = vstv %s841
        %v844 = vstv %s842
        %v845 = vsel %vm257, %v843, %v844
        %v847 = vcombine.high %v840, %v840
        %v849 = vunpack.c.l.s4 1983009808
        %v850 = vunpack.c.0.s8 %v849
        %v851 = vlaneseq
        %v852 = vshrl.u32 %v851, 7
        %v853 = vsub.s32 %v850, %v852
        %v854 = vrot.slane %v840, %v853
        %v856 = vunpack.c.l.s4 1983009808
        %v857 = vunpack.c.0.s8 %v856
        %v858 = vlaneseq
        %v859 = vshrl.u32 %v858, 7
        %v860 = vsub.s32 %v857, %v859
        %v861 = vrot.slane %v847, %v860
        %v862 = vcombine.high %v854, %v854
        %863 = vrot.lane.b32.xlu0 %v854, 82
        %v864 = vpop.permute.xlu0 %863
        %865 = vrot.lane.b32.xlu0 %v862, 82
        %v866 = vpop.permute.xlu0 %865
        %867 = vrot.lane.b32.xlu0 %v861, 82
        %v868 = vpop.permute.xlu0 %867
        %vm869 = vcmask 670720
        %v870 = vsel %vm869, %v864, %v866
        %v871 = vsel %vm869, %v866, %v868
        %v874 = vmul.f32 %v845, %v870
        %v875 = vmul.f32 %v845, %v871
        %v876 = vadd.f32 %v838, %v874
        %v877 = vadd.f32 %v839, %v875
        %v878 = vsel %vm245, 1, 0
        %v879 = vsel %vm246, 1, 0
        %vm880 = vcmp.eq.s32.totalorder %v878, 1
        %vm881 = vcmp.eq.s32.totalorder %v879, 1
        %v882 = vsel %vm880, %v876, 0.0
        %v883 = vsel %vm881, %v877, 0.0
        %v884 = vadd.f32 %v610, %v882
        %v885 = vadd.f32 %v611, %v883
        %v886 = vld [vmem:[#allocation2] sm:$0x3f]
        %s887 = sld [smem:[#allocation7 + $0x2]]
        %s888 = sld [smem:[#allocation7 + $0x33]]
        %v889 = vstv %s887
        %v890 = vstv %s888
        %v891 = vsel %vm257, %v889, %v890
        %v893 = vcombine.high %v886, %v886
        %v895 = vunpack.c.l.s4 1983009808
        %v896 = vunpack.c.0.s8 %v895
        %v897 = vlaneseq
        %v898 = vshrl.u32 %v897, 7
        %v899 = vsub.s32 %v896, %v898
        %v900 = vrot.slane %v886, %v899
        %v902 = vunpack.c.l.s4 1983009808
        %v903 = vunpack.c.0.s8 %v902
        %v904 = vlaneseq
        %v905 = vshrl.u32 %v904, 7
        %v906 = vsub.s32 %v903, %v905
        %v907 = vrot.slane %v893, %v906
        %v908 = vcombine.high %v900, %v900
        %909 = vrot.lane.b32.xlu0 %v900, 49
        %v910 = vpop.permute.xlu0 %909
        %911 = vrot.lane.b32.xlu0 %v908, 49
        %v912 = vpop.permute.xlu0 %911
        %913 = vrot.lane.b32.xlu0 %v907, 49
        %v914 = vpop.permute.xlu0 %913
        %vm915 = vcmask 400384
        %v916 = vsel %vm915, %v910, %v912
        %v917 = vsel %vm915, %v912, %v914
        %v920 = vmul.f32 %v891, %v916
        %v921 = vmul.f32 %v891, %v917
        %v922 = vadd.f32 %v920, 0.0
        %v923 = vadd.f32 %v921, 0.0
        %v924 = vld [vmem:[#allocation2] sm:$0x3f]
        %s925 = sld [smem:[#allocation7 + $0x9]]
        %s926 = sld [smem:[#allocation7 + $0x3a]]
        %v927 = vstv %s925
        %v928 = vstv %s926
        %v929 = vsel %vm257, %v927, %v928
        %v931 = vcombine.high %v924, %v924
        %v933 = vunpack.c.l.s4 1983009808
        %v934 = vunpack.c.0.s8 %v933
        %v935 = vlaneseq
        %v936 = vshrl.u32 %v935, 7
        %v937 = vsub.s32 %v934, %v936
        %v938 = vrot.slane %v924, %v937
        %v940 = vunpack.c.l.s4 1983009808
        %v941 = vunpack.c.0.s8 %v940
        %v942 = vlaneseq
        %v943 = vshrl.u32 %v942, 7
        %v944 = vsub.s32 %v941, %v943
        %v945 = vrot.slane %v931, %v944
        %v946 = vcombine.high %v938, %v938
        %947 = vrot.lane.b32.xlu0 %v938, 33
        %v948 = vpop.permute.xlu0 %947
        %949 = vrot.lane.b32.xlu0 %v946, 33
        %v950 = vpop.permute.xlu0 %949
        %951 = vrot.lane.b32.xlu0 %v945, 33
        %v952 = vpop.permute.xlu0 %951
        %vm953 = vcmask 269312
        %v954 = vsel %vm953, %v948, %v950
        %v955 = vsel %vm953, %v950, %v952
        %v958 = vmul.f32 %v929, %v954
        %v959 = vmul.f32 %v929, %v955
        %v960 = vadd.f32 %v922, %v958
        %v961 = vadd.f32 %v923, %v959
        %v962 = vld [vmem:[#allocation2] sm:$0x3f]
        %s963 = sld [smem:[#allocation7 + $0x10]]
        %s964 = sld [smem:[#allocation7 + $0x41]]
        %v965 = vstv %s963
        %v966 = vstv %s964
        %v967 = vsel %vm257, %v965, %v966
        %v969 = vcombine.high %v962, %v962
        %v971 = vunpack.c.l.s4 1983009808
        %v972 = vunpack.c.0.s8 %v971
        %v973 = vlaneseq
        %v974 = vshrl.u32 %v973, 7
        %v975 = vsub.s32 %v972, %v974
        %v976 = vrot.slane %v962, %v975
        %v978 = vunpack.c.l.s4 1983009808
        %v979 = vunpack.c.0.s8 %v978
        %v980 = vlaneseq
        %v981 = vshrl.u32 %v980, 7
        %v982 = vsub.s32 %v979, %v981
        %v983 = vrot.slane %v969, %v982
        %v984 = vcombine.high %v976, %v976
        %985 = vrot.lane.b32.xlu0 %v976, 17
        %v986 = vpop.permute.xlu0 %985
        %987 = vrot.lane.b32.xlu0 %v984, 17
        %v988 = vpop.permute.xlu0 %987
        %989 = vrot.lane.b32.xlu0 %v983, 17
        %v990 = vpop.permute.xlu0 %989
        %vm991 = vcmask 138240
        %v992 = vsel %vm991, %v986, %v988
        %v993 = vsel %vm991, %v988, %v990
        %v996 = vmul.f32 %v967, %v992
        %v997 = vmul.f32 %v967, %v993
        %v998 = vadd.f32 %v960, %v996
        %v999 = vadd.f32 %v961, %v997
        %v1000 = vld [vmem:[#allocation2] sm:$0x3f]
        %s1001 = sld [smem:[#allocation7 + $0x17]]
        %s1002 = sld [smem:[#allocation7 + $0x48]]
        %v1003 = vstv %s1001
        %v1004 = vstv %s1002
        %v1005 = vsel %vm257, %v1003, %v1004
        %v1007 = vcombine.high %v1000, %v1000
        %v1009 = vunpack.c.l.s4 1983009808
        %v1010 = vunpack.c.0.s8 %v1009
        %v1011 = vlaneseq
        %v1012 = vshrl.u32 %v1011, 7
        %v1013 = vsub.s32 %v1010, %v1012
        %v1014 = vrot.slane %v1000, %v1013
        %v1016 = vunpack.c.l.s4 1983009808
        %v1017 = vunpack.c.0.s8 %v1016
        %v1018 = vlaneseq
        %v1019 = vshrl.u32 %v1018, 7
        %v1020 = vsub.s32 %v1017, %v1019
        %v1021 = vrot.slane %v1007, %v1020
        %v1022 = vcombine.high %v1014, %v1014
        %1023 = vrot.lane.b32.xlu0 %v1014, 1
        %v1024 = vpop.permute.xlu0 %1023
        %1025 = vrot.lane.b32.xlu0 %v1022, 1
        %v1026 = vpop.permute.xlu0 %1025
        %1027 = vrot.lane.b32.xlu0 %v1021, 1
        %v1028 = vpop.permute.xlu0 %1027
        %vm1029 = vcmask 7168
        %v1030 = vsel %vm1029, %v1024, %v1026
        %v1031 = vsel %vm1029, %v1026, %v1028
        %v1034 = vmul.f32 %v1005, %v1030
        %v1035 = vmul.f32 %v1005, %v1031
        %v1036 = vadd.f32 %v998, %v1034
        %v1037 = vadd.f32 %v999, %v1035
        %v1038 = vld [vmem:[#allocation2 + $0x2] sm:$0x3f]
        %s1039 = sld [smem:[#allocation7 + $0x1e]]
        %s1040 = sld [smem:[#allocation7 + $0x4f]]
        %v1041 = vstv %s1039
        %v1042 = vstv %s1040
        %v1043 = vsel %vm257, %v1041, %v1042
        %v1045 = vcombine.high %v1038, %v1038
        %v1047 = vunpack.c.l.s4 1983009808
        %v1048 = vunpack.c.0.s8 %v1047
        %v1049 = vlaneseq
        %v1050 = vshrl.u32 %v1049, 7
        %v1051 = vsub.s32 %v1048, %v1050
        %v1052 = vrot.slane %v1038, %v1051
        %v1054 = vunpack.c.l.s4 1983009808
        %v1055 = vunpack.c.0.s8 %v1054
        %v1056 = vlaneseq
        %v1057 = vshrl.u32 %v1056, 7
        %v1058 = vsub.s32 %v1055, %v1057
        %v1059 = vrot.slane %v1045, %v1058
        %v1060 = vcombine.high %v1052, %v1052
        %1061 = vrot.lane.b32.xlu0 %v1052, 113
        %v1062 = vpop.permute.xlu0 %1061
        %1063 = vrot.lane.b32.xlu0 %v1060, 113
        %v1064 = vpop.permute.xlu0 %1063
        %1065 = vrot.lane.b32.xlu0 %v1059, 113
        %v1066 = vpop.permute.xlu0 %1065
        %vm1067 = vcmask 924672
        %v1068 = vsel %vm1067, %v1062, %v1064
        %v1069 = vsel %vm1067, %v1064, %v1066
        %v1072 = vmul.f32 %v1043, %v1068
        %v1073 = vmul.f32 %v1043, %v1069
        %v1074 = vadd.f32 %v1036, %v1072
        %v1075 = vadd.f32 %v1037, %v1073
        %v1076 = vld [vmem:[#allocation2 + $0x2] sm:$0x3f]
        %s1077 = sld [smem:[#allocation7 + $0x25]]
        %s1078 = sld [smem:[#allocation7 + $0x56]]
        %v1079 = vstv %s1077
        %v1080 = vstv %s1078
        %v1081 = vsel %vm257, %v1079, %v1080
        %v1083 = vcombine.high %v1076, %v1076
        %v1085 = vunpack.c.l.s4 1983009808
        %v1086 = vunpack.c.0.s8 %v1085
        %v1087 = vlaneseq
        %v1088 = vshrl.u32 %v1087, 7
        %v1089 = vsub.s32 %v1086, %v1088
        %v1090 = vrot.slane %v1076, %v1089
        %v1092 = vunpack.c.l.s4 1983009808
        %v1093 = vunpack.c.0.s8 %v1092
        %v1094 = vlaneseq
        %v1095 = vshrl.u32 %v1094, 7
        %v1096 = vsub.s32 %v1093, %v1095
        %v1097 = vrot.slane %v1083, %v1096
        %v1098 = vcombine.high %v1090, %v1090
        %1099 = vrot.lane.b32.xlu0 %v1090, 97
        %v1100 = vpop.permute.xlu0 %1099
        %1101 = vrot.lane.b32.xlu0 %v1098, 97
        %v1102 = vpop.permute.xlu0 %1101
        %1103 = vrot.lane.b32.xlu0 %v1097, 97
        %v1104 = vpop.permute.xlu0 %1103
        %vm1105 = vcmask 793600
        %v1106 = vsel %vm1105, %v1100, %v1102
        %v1107 = vsel %vm1105, %v1102, %v1104
        %v1110 = vmul.f32 %v1081, %v1106
        %v1111 = vmul.f32 %v1081, %v1107
        %v1112 = vadd.f32 %v1074, %v1110
        %v1113 = vadd.f32 %v1075, %v1111
        %v1114 = vld [vmem:[#allocation2 + $0x2] sm:$0x3f]
        %s1115 = sld [smem:[#allocation7 + $0x2c]]
        %s1116 = sld [smem:[#allocation7 + $0x5d]]
        %v1117 = vstv %s1115
        %v1118 = vstv %s1116
        %v1119 = vsel %vm257, %v1117, %v1118
        %v1121 = vcombine.high %v1114, %v1114
        %v1123 = vunpack.c.l.s4 1983009808
        %v1124 = vunpack.c.0.s8 %v1123
        %v1125 = vlaneseq
        %v1126 = vshrl.u32 %v1125, 7
        %v1127 = vsub.s32 %v1124, %v1126
        %v1128 = vrot.slane %v1114, %v1127
        %v1130 = vunpack.c.l.s4 1983009808
        %v1131 = vunpack.c.0.s8 %v1130
        %v1132 = vlaneseq
        %v1133 = vshrl.u32 %v1132, 7
        %v1134 = vsub.s32 %v1131, %v1133
        %v1135 = vrot.slane %v1121, %v1134
        %v1136 = vcombine.high %v1128, %v1128
        %1137 = vrot.lane.b32.xlu0 %v1128, 81
        %v1138 = vpop.permute.xlu0 %1137
        %1139 = vrot.lane.b32.xlu0 %v1136, 81
        %v1140 = vpop.permute.xlu0 %1139
        %1141 = vrot.lane.b32.xlu0 %v1135, 81
        %v1142 = vpop.permute.xlu0 %1141
        %vm1143 = vcmask 662528
        %v1144 = vsel %vm1143, %v1138, %v1140
        %v1145 = vsel %vm1143, %v1140, %v1142
        %v1148 = vmul.f32 %v1119, %v1144
        %v1149 = vmul.f32 %v1119, %v1145
        %v1150 = vadd.f32 %v1112, %v1148
        %v1151 = vadd.f32 %v1113, %v1149
        %v1152 = vsel %vm247, 1, 0
        %v1153 = vsel %vm248, 1, 0
        %vm1154 = vcmp.eq.s32.totalorder %v1152, 1
        %vm1155 = vcmp.eq.s32.totalorder %v1153, 1
        %v1156 = vsel %vm1154, %v1150, 0.0
        %v1157 = vsel %vm1155, %v1151, 0.0
        %v1158 = vadd.f32 %v884, %v1156
        %v1159 = vadd.f32 %v885, %v1157
        %v1160 = vld [vmem:[#allocation2] sm:$0x3f]
        %s1161 = sld [smem:[#allocation7 + $0x3]]
        %s1162 = sld [smem:[#allocation7 + $0x34]]
        %v1163 = vstv %s1161
        %v1164 = vstv %s1162
        %v1165 = vsel %vm257, %v1163, %v1164
        %v1167 = vcombine.high %v1160, %v1160
        %v1169 = vunpack.c.l.s4 1983009808
        %v1170 = vunpack.c.0.s8 %v1169
        %v1171 = vlaneseq
        %v1172 = vshrl.u32 %v1171, 7
        %v1173 = vsub.s32 %v1170, %v1172
        %v1174 = vrot.slane %v1160, %v1173
        %v1176 = vunpack.c.l.s4 1983009808
        %v1177 = vunpack.c.0.s8 %v1176
        %v1178 = vlaneseq
        %v1179 = vshrl.u32 %v1178, 7
        %v1180 = vsub.s32 %v1177, %v1179
        %v1181 = vrot.slane %v1167, %v1180
        %v1182 = vcombine.high %v1174, %v1174
        %1183 = vrot.lane.b32.xlu0 %v1174, 48
        %v1184 = vpop.permute.xlu0 %1183
        %1185 = vrot.lane.b32.xlu0 %v1182, 48
        %v1186 = vpop.permute.xlu0 %1185
        %1187 = vrot.lane.b32.xlu0 %v1181, 48
        %v1188 = vpop.permute.xlu0 %1187
        %vm1189 = vcmask 392192
        %v1190 = vsel %vm1189, %v1184, %v1186
        %v1191 = vsel %vm1189, %v1186, %v1188
        %v1194 = vmul.f32 %v1165, %v1190
        %v1195 = vmul.f32 %v1165, %v1191
        %v1196 = vadd.f32 %v1194, 0.0
        %v1197 = vadd.f32 %v1195, 0.0
        %v1198 = vld [vmem:[#allocation2] sm:$0x3f]
        %s1199 = sld [smem:[#allocation7 + $0xa]]
        %s1200 = sld [smem:[#allocation7 + $0x3b]]
        %v1201 = vstv %s1199
        %v1202 = vstv %s1200
        %v1203 = vsel %vm257, %v1201, %v1202
        %v1205 = vcombine.high %v1198, %v1198
        %v1207 = vunpack.c.l.s4 1983009808
        %v1208 = vunpack.c.0.s8 %v1207
        %v1209 = vlaneseq
        %v1210 = vshrl.u32 %v1209, 7
        %v1211 = vsub.s32 %v1208, %v1210
        %v1212 = vrot.slane %v1198, %v1211
        %v1214 = vunpack.c.l.s4 1983009808
        %v1215 = vunpack.c.0.s8 %v1214
        %v1216 = vlaneseq
        %v1217 = vshrl.u32 %v1216, 7
        %v1218 = vsub.s32 %v1215, %v1217
        %v1219 = vrot.slane %v1205, %v1218
        %v1220 = vcombine.high %v1212, %v1212
        %1221 = vrot.lane.b32.xlu0 %v1212, 32
        %v1222 = vpop.permute.xlu0 %1221
        %1223 = vrot.lane.b32.xlu0 %v1220, 32
        %v1224 = vpop.permute.xlu0 %1223
        %1225 = vrot.lane.b32.xlu0 %v1219, 32
        %v1226 = vpop.permute.xlu0 %1225
        %vm1227 = vcmask 261120
        %v1228 = vsel %vm1227, %v1222, %v1224
        %v1229 = vsel %vm1227, %v1224, %v1226
        %v1232 = vmul.f32 %v1203, %v1228
        %v1233 = vmul.f32 %v1203, %v1229
        %v1234 = vadd.f32 %v1196, %v1232
        %v1235 = vadd.f32 %v1197, %v1233
        %v1236 = vld [vmem:[#allocation2] sm:$0x3f]
        %s1237 = sld [smem:[#allocation7 + $0x11]]
        %s1238 = sld [smem:[#allocation7 + $0x42]]
        %v1239 = vstv %s1237
        %v1240 = vstv %s1238
        %v1241 = vsel %vm257, %v1239, %v1240
        %v1243 = vcombine.high %v1236, %v1236
        %v1245 = vunpack.c.l.s4 1983009808
        %v1246 = vunpack.c.0.s8 %v1245
        %v1247 = vlaneseq
        %v1248 = vshrl.u32 %v1247, 7
        %v1249 = vsub.s32 %v1246, %v1248
        %v1250 = vrot.slane %v1236, %v1249
        %v1252 = vunpack.c.l.s4 1983009808
        %v1253 = vunpack.c.0.s8 %v1252
        %v1254 = vlaneseq
        %v1255 = vshrl.u32 %v1254, 7
        %v1256 = vsub.s32 %v1253, %v1255
        %v1257 = vrot.slane %v1243, %v1256
        %v1258 = vcombine.high %v1250, %v1250
        %1259 = vrot.lane.b32.xlu0 %v1250, 16
        %v1260 = vpop.permute.xlu0 %1259
        %1261 = vrot.lane.b32.xlu0 %v1258, 16
        %v1262 = vpop.permute.xlu0 %1261
        %1263 = vrot.lane.b32.xlu0 %v1257, 16
        %v1264 = vpop.permute.xlu0 %1263
        %vm1265 = vcmask 130048
        %v1266 = vsel %vm1265, %v1260, %v1262
        %v1267 = vsel %vm1265, %v1262, %v1264
        %v1270 = vmul.f32 %v1241, %v1266
        %v1271 = vmul.f32 %v1241, %v1267
        %v1272 = vadd.f32 %v1234, %v1270
        %v1273 = vadd.f32 %v1235, %v1271
        %v1274 = vld [vmem:[#allocation2 + $0x2] sm:$0xf]
        %s1275 = sld [smem:[#allocation7 + $0x18]]
        %s1276 = sld [smem:[#allocation7 + $0x49]]
        %v1277 = vstv %s1275
        %v1278 = vstv %s1276
        %v1279 = vsel %vm257, %v1277, %v1278
        %v1282 = vunpack.c.l.s4 1983009808
        %v1283 = vunpack.c.0.s8 %v1282
        %v1284 = vlaneseq
        %v1285 = vshrl.u32 %v1284, 7
        %v1286 = vsub.s32 %v1283, %v1285
        %v1287 = vrot.slane %v1274, %v1286
        %v1288 = vcombine.high %v1287, %v1287
        %v1291 = vmul.f32 %v1279, %v1287
        %v1292 = vmul.f32 %v1279, %v1288
        %v1293 = vadd.f32 %v1272, %v1291
        %v1294 = vadd.f32 %v1273, %v1292
        %v1295 = vld [vmem:[#allocation2 + $0x2] sm:$0x3f]
        %s1296 = sld [smem:[#allocation7 + $0x1f]]
        %s1297 = sld [smem:[#allocation7 + $0x50]]
        %v1298 = vstv %s1296
        %v1299 = vstv %s1297
        %v1300 = vsel %vm257, %v1298, %v1299
        %v1302 = vcombine.high %v1295, %v1295
        %v1304 = vunpack.c.l.s4 1983009808
        %v1305 = vunpack.c.0.s8 %v1304
        %v1306 = vlaneseq
        %v1307 = vshrl.u32 %v1306, 7
        %v1308 = vsub.s32 %v1305, %v1307
        %v1309 = vrot.slane %v1295, %v1308
        %v1311 = vunpack.c.l.s4 1983009808
        %v1312 = vunpack.c.0.s8 %v1311
        %v1313 = vlaneseq
        %v1314 = vshrl.u32 %v1313, 7
        %v1315 = vsub.s32 %v1312, %v1314
        %v1316 = vrot.slane %v1302, %v1315
        %v1317 = vcombine.high %v1309, %v1309
        %1318 = vrot.lane.b32.xlu0 %v1309, 112
        %v1319 = vpop.permute.xlu0 %1318
        %1320 = vrot.lane.b32.xlu0 %v1317, 112
        %v1321 = vpop.permute.xlu0 %1320
        %1322 = vrot.lane.b32.xlu0 %v1316, 112
        %v1323 = vpop.permute.xlu0 %1322
        %vm1324 = vcmask 916480
        %v1325 = vsel %vm1324, %v1319, %v1321
        %v1326 = vsel %vm1324, %v1321, %v1323
        %v1329 = vmul.f32 %v1300, %v1325
        %v1330 = vmul.f32 %v1300, %v1326
        %v1331 = vadd.f32 %v1293, %v1329
        %v1332 = vadd.f32 %v1294, %v1330
        %v1333 = vld [vmem:[#allocation2 + $0x2] sm:$0x3f]
        %s1334 = sld [smem:[#allocation7 + $0x26]]
        %s1335 = sld [smem:[#allocation7 + $0x57]]
        %v1336 = vstv %s1334
        %v1337 = vstv %s1335
        %v1338 = vsel %vm257, %v1336, %v1337
        %v1340 = vcombine.high %v1333, %v1333
        %v1342 = vunpack.c.l.s4 1983009808
        %v1343 = vunpack.c.0.s8 %v1342
        %v1344 = vlaneseq
        %v1345 = vshrl.u32 %v1344, 7
        %v1346 = vsub.s32 %v1343, %v1345
        %v1347 = vrot.slane %v1333, %v1346
        %v1349 = vunpack.c.l.s4 1983009808
        %v1350 = vunpack.c.0.s8 %v1349
        %v1351 = vlaneseq
        %v1352 = vshrl.u32 %v1351, 7
        %v1353 = vsub.s32 %v1350, %v1352
        %v1354 = vrot.slane %v1340, %v1353
        %v1355 = vcombine.high %v1347, %v1347
        %1356 = vrot.lane.b32.xlu0 %v1347, 96
        %v1357 = vpop.permute.xlu0 %1356
        %1358 = vrot.lane.b32.xlu0 %v1355, 96
        %v1359 = vpop.permute.xlu0 %1358
        %1360 = vrot.lane.b32.xlu0 %v1354, 96
        %v1361 = vpop.permute.xlu0 %1360
        %vm1362 = vcmask 785408
        %v1363 = vsel %vm1362, %v1357, %v1359
        %v1364 = vsel %vm1362, %v1359, %v1361
        %v1367 = vmul.f32 %v1338, %v1363
        %v1368 = vmul.f32 %v1338, %v1364
        %v1369 = vadd.f32 %v1331, %v1367
        %v1370 = vadd.f32 %v1332, %v1368
        %v1371 = vld [vmem:[#allocation2 + $0x2] sm:$0x3f]
        %s1372 = sld [smem:[#allocation7 + $0x2d]]
        %s1373 = sld [smem:[#allocation7 + $0x5e]]
        %v1374 = vstv %s1372
        %v1375 = vstv %s1373
        %v1376 = vsel %vm257, %v1374, %v1375
        %v1378 = vcombine.high %v1371, %v1371
        %v1380 = vunpack.c.l.s4 1983009808
        %v1381 = vunpack.c.0.s8 %v1380
        %v1382 = vlaneseq
        %v1383 = vshrl.u32 %v1382, 7
        %v1384 = vsub.s32 %v1381, %v1383
        %v1385 = vrot.slane %v1371, %v1384
        %v1387 = vunpack.c.l.s4 1983009808
        %v1388 = vunpack.c.0.s8 %v1387
        %v1389 = vlaneseq
        %v1390 = vshrl.u32 %v1389, 7
        %v1391 = vsub.s32 %v1388, %v1390
        %v1392 = vrot.slane %v1378, %v1391
        %v1393 = vcombine.high %v1385, %v1385
        %1394 = vrot.lane.b32.xlu0 %v1385, 80
        %v1395 = vpop.permute.xlu0 %1394
        %1396 = vrot.lane.b32.xlu0 %v1393, 80
        %v1397 = vpop.permute.xlu0 %1396
        %1398 = vrot.lane.b32.xlu0 %v1392, 80
        %v1399 = vpop.permute.xlu0 %1398
        %vm1400 = vcmask 654336
        %v1401 = vsel %vm1400, %v1395, %v1397
        %v1402 = vsel %vm1400, %v1397, %v1399
        %v1405 = vmul.f32 %v1376, %v1401
        %v1406 = vmul.f32 %v1376, %v1402
        %v1407 = vadd.f32 %v1369, %v1405
        %v1408 = vadd.f32 %v1370, %v1406
        %v1409 = vadd.f32 %v1158, %v1407
        %v1410 = vadd.f32 %v1159, %v1408
        %v1411 = vld [vmem:[#allocation2] sm:$0x3f]
        %s1412 = sld [smem:[#allocation7 + $0x4]]
        %s1413 = sld [smem:[#allocation7 + $0x35]]
        %v1414 = vstv %s1412
        %v1415 = vstv %s1413
        %v1416 = vsel %vm257, %v1414, %v1415
        %v1418 = vcombine.high %v1411, %v1411
        %v1420 = vunpack.c.l.s4 1983009808
        %v1421 = vunpack.c.0.s8 %v1420
        %v1422 = vlaneseq
        %v1423 = vshrl.u32 %v1422, 7
        %v1424 = vsub.s32 %v1421, %v1423
        %v1425 = vrot.slane %v1411, %v1424
        %v1427 = vunpack.c.l.s4 1983009808
        %v1428 = vunpack.c.0.s8 %v1427
        %v1429 = vlaneseq
        %v1430 = vshrl.u32 %v1429, 7
        %v1431 = vsub.s32 %v1428, %v1430
        %v1432 = vrot.slane %v1418, %v1431
        %v1433 = vcombine.high %v1425, %v1425
        %1434 = vrot.lane.b32.xlu0 %v1425, 47
        %v1435 = vpop.permute.xlu0 %1434
        %1436 = vrot.lane.b32.xlu0 %v1433, 47
        %v1437 = vpop.permute.xlu0 %1436
        %1438 = vrot.lane.b32.xlu0 %v1432, 47
        %v1439 = vpop.permute.xlu0 %1438
        %vm1440 = vcmask 384000
        %v1441 = vsel %vm1440, %v1435, %v1437
        %v1442 = vsel %vm1440, %v1437, %v1439
        %v1445 = vmul.f32 %v1416, %v1441
        %v1446 = vmul.f32 %v1416, %v1442
        %v1447 = vadd.f32 %v1445, 0.0
        %v1448 = vadd.f32 %v1446, 0.0
        %v1449 = vld [vmem:[#allocation2] sm:$0x3f]
        %s1450 = sld [smem:[#allocation7 + $0xb]]
        %s1451 = sld [smem:[#allocation7 + $0x3c]]
        %v1452 = vstv %s1450
        %v1453 = vstv %s1451
        %v1454 = vsel %vm257, %v1452, %v1453
        %v1456 = vcombine.high %v1449, %v1449
        %v1458 = vunpack.c.l.s4 1983009808
        %v1459 = vunpack.c.0.s8 %v1458
        %v1460 = vlaneseq
        %v1461 = vshrl.u32 %v1460, 7
        %v1462 = vsub.s32 %v1459, %v1461
        %v1463 = vrot.slane %v1449, %v1462
        %v1465 = vunpack.c.l.s4 1983009808
        %v1466 = vunpack.c.0.s8 %v1465
        %v1467 = vlaneseq
        %v1468 = vshrl.u32 %v1467, 7
        %v1469 = vsub.s32 %v1466, %v1468
        %v1470 = vrot.slane %v1456, %v1469
        %v1471 = vcombine.high %v1463, %v1463
        %1472 = vrot.lane.b32.xlu0 %v1463, 31
        %v1473 = vpop.permute.xlu0 %1472
        %1474 = vrot.lane.b32.xlu0 %v1471, 31
        %v1475 = vpop.permute.xlu0 %1474
        %1476 = vrot.lane.b32.xlu0 %v1470, 31
        %v1477 = vpop.permute.xlu0 %1476
        %vm1478 = vcmask 252928
        %v1479 = vsel %vm1478, %v1473, %v1475
        %v1480 = vsel %vm1478, %v1475, %v1477
        %v1483 = vmul.f32 %v1454, %v1479
        %v1484 = vmul.f32 %v1454, %v1480
        %v1485 = vadd.f32 %v1447, %v1483
        %v1486 = vadd.f32 %v1448, %v1484
        %v1487 = vld [vmem:[#allocation2] sm:$0x3f]
        %s1488 = sld [smem:[#allocation7 + $0x12]]
        %s1489 = sld [smem:[#allocation7 + $0x43]]
        %v1490 = vstv %s1488
        %v1491 = vstv %s1489
        %v1492 = vsel %vm257, %v1490, %v1491
        %v1494 = vcombine.high %v1487, %v1487
        %v1496 = vunpack.c.l.s4 1983009808
        %v1497 = vunpack.c.0.s8 %v1496
        %v1498 = vlaneseq
        %v1499 = vshrl.u32 %v1498, 7
        %v1500 = vsub.s32 %v1497, %v1499
        %v1501 = vrot.slane %v1487, %v1500
        %v1503 = vunpack.c.l.s4 1983009808
        %v1504 = vunpack.c.0.s8 %v1503
        %v1505 = vlaneseq
        %v1506 = vshrl.u32 %v1505, 7
        %v1507 = vsub.s32 %v1504, %v1506
        %v1508 = vrot.slane %v1494, %v1507
        %v1509 = vcombine.high %v1501, %v1501
        %1510 = vrot.lane.b32.xlu0 %v1501, 15
        %v1511 = vpop.permute.xlu0 %1510
        %1512 = vrot.lane.b32.xlu0 %v1509, 15
        %v1513 = vpop.permute.xlu0 %1512
        %1514 = vrot.lane.b32.xlu0 %v1508, 15
        %v1515 = vpop.permute.xlu0 %1514
        %vm1516 = vcmask 121856
        %v1517 = vsel %vm1516, %v1511, %v1513
        %v1518 = vsel %vm1516, %v1513, %v1515
        %v1521 = vmul.f32 %v1492, %v1517
        %v1522 = vmul.f32 %v1492, %v1518
        %v1523 = vadd.f32 %v1485, %v1521
        %v1524 = vadd.f32 %v1486, %v1522
        %v1525 = vld [vmem:[#allocation2 + $0x2] sm:$0x3f]
        %s1526 = sld [smem:[#allocation7 + $0x19]]
        %s1527 = sld [smem:[#allocation7 + $0x4a]]
        %v1528 = vstv %s1526
        %v1529 = vstv %s1527
        %v1530 = vsel %vm257, %v1528, %v1529
        %v1532 = vcombine.high %v1525, %v1525
        %v1534 = vunpack.c.l.s4 1983009808
        %v1535 = vunpack.c.0.s8 %v1534
        %v1536 = vlaneseq
        %v1537 = vshrl.u32 %v1536, 7
        %v1538 = vsub.s32 %v1535, %v1537
        %v1539 = vrot.slane %v1525, %v1538
        %v1541 = vunpack.c.l.s4 1983009808
        %v1542 = vunpack.c.0.s8 %v1541
        %v1543 = vlaneseq
        %v1544 = vshrl.u32 %v1543, 7
        %v1545 = vsub.s32 %v1542, %v1544
        %v1546 = vrot.slane %v1532, %v1545
        %v1547 = vcombine.high %v1539, %v1539
        %1548 = vrot.lane.b32.xlu0 %v1539, 127
        %v1549 = vpop.permute.xlu0 %1548
        %1550 = vrot.lane.b32.xlu0 %v1547, 127
        %v1551 = vpop.permute.xlu0 %1550
        %1552 = vrot.lane.b32.xlu0 %v1546, 127
        %v1553 = vpop.permute.xlu0 %1552
        %vm1554 = vcmask 1039360
        %v1555 = vsel %vm1554, %v1549, %v1551
        %v1556 = vsel %vm1554, %v1551, %v1553
        %v1559 = vmul.f32 %v1530, %v1555
        %v1560 = vmul.f32 %v1530, %v1556
        %v1561 = vadd.f32 %v1523, %v1559
        %v1562 = vadd.f32 %v1524, %v1560
        %v1563 = vld [vmem:[#allocation2 + $0x2] sm:$0x3f]
        %s1564 = sld [smem:[#allocation7 + $0x20]]
        %s1565 = sld [smem:[#allocation7 + $0x51]]
        %v1566 = vstv %s1564
        %v1567 = vstv %s1565
        %v1568 = vsel %vm257, %v1566, %v1567
        %v1570 = vcombine.high %v1563, %v1563
        %v1572 = vunpack.c.l.s4 1983009808
        %v1573 = vunpack.c.0.s8 %v1572
        %v1574 = vlaneseq
        %v1575 = vshrl.u32 %v1574, 7
        %v1576 = vsub.s32 %v1573, %v1575
        %v1577 = vrot.slane %v1563, %v1576
        %v1579 = vunpack.c.l.s4 1983009808
        %v1580 = vunpack.c.0.s8 %v1579
        %v1581 = vlaneseq
        %v1582 = vshrl.u32 %v1581, 7
        %v1583 = vsub.s32 %v1580, %v1582
        %v1584 = vrot.slane %v1570, %v1583
        %v1585 = vcombine.high %v1577, %v1577
        %1586 = vrot.lane.b32.xlu0 %v1577, 111
        %v1587 = vpop.permute.xlu0 %1586
        %1588 = vrot.lane.b32.xlu0 %v1585, 111
        %v1589 = vpop.permute.xlu0 %1588
        %1590 = vrot.lane.b32.xlu0 %v1584, 111
        %v1591 = vpop.permute.xlu0 %1590
        %vm1592 = vcmask 908288
        %v1593 = vsel %vm1592, %v1587, %v1589
        %v1594 = vsel %vm1592, %v1589, %v1591
        %v1597 = vmul.f32 %v1568, %v1593
        %v1598 = vmul.f32 %v1568, %v1594
        %v1599 = vadd.f32 %v1561, %v1597
        %v1600 = vadd.f32 %v1562, %v1598
        %v1601 = vld [vmem:[#allocation2 + $0x2] sm:$0x3f]
        %s1602 = sld [smem:[#allocation7 + $0x27]]
        %s1603 = sld [smem:[#allocation7 + $0x58]]
        %v1604 = vstv %s1602
        %v1605 = vstv %s1603
        %v1606 = vsel %vm257, %v1604, %v1605
        %v1608 = vcombine.high %v1601, %v1601
        %v1610 = vunpack.c.l.s4 1983009808
        %v1611 = vunpack.c.0.s8 %v1610
        %v1612 = vlaneseq
        %v1613 = vshrl.u32 %v1612, 7
        %v1614 = vsub.s32 %v1611, %v1613
        %v1615 = vrot.slane %v1601, %v1614
        %v1617 = vunpack.c.l.s4 1983009808
        %v1618 = vunpack.c.0.s8 %v1617
        %v1619 = vlaneseq
        %v1620 = vshrl.u32 %v1619, 7
        %v1621 = vsub.s32 %v1618, %v1620
        %v1622 = vrot.slane %v1608, %v1621
        %v1623 = vcombine.high %v1615, %v1615
        %1624 = vrot.lane.b32.xlu0 %v1615, 95
        %v1625 = vpop.permute.xlu0 %1624
        %1626 = vrot.lane.b32.xlu0 %v1623, 95
        %v1627 = vpop.permute.xlu0 %1626
        %1628 = vrot.lane.b32.xlu0 %v1622, 95
        %v1629 = vpop.permute.xlu0 %1628
        %vm1630 = vcmask 777216
        %v1631 = vsel %vm1630, %v1625, %v1627
        %v1632 = vsel %vm1630, %v1627, %v1629
        %v1635 = vmul.f32 %v1606, %v1631
        %v1636 = vmul.f32 %v1606, %v1632
        %v1637 = vadd.f32 %v1599, %v1635
        %v1638 = vadd.f32 %v1600, %v1636
        %v1639 = vld [vmem:[#allocation2 + $0x2] sm:$0x3f]
        %s1640 = sld [smem:[#allocation7 + $0x2e]]
        %s1641 = sld [smem:[#allocation7 + $0x5f]]
        %v1642 = vstv %s1640
        %v1643 = vstv %s1641
        %v1644 = vsel %vm257, %v1642, %v1643
        %v1646 = vcombine.high %v1639, %v1639
        %v1648 = vunpack.c.l.s4 1983009808
        %v1649 = vunpack.c.0.s8 %v1648
        %v1650 = vlaneseq
        %v1651 = vshrl.u32 %v1650, 7
        %v1652 = vsub.s32 %v1649, %v1651
        %v1653 = vrot.slane %v1639, %v1652
        %v1655 = vunpack.c.l.s4 1983009808
        %v1656 = vunpack.c.0.s8 %v1655
        %v1657 = vlaneseq
        %v1658 = vshrl.u32 %v1657, 7
        %v1659 = vsub.s32 %v1656, %v1658
        %v1660 = vrot.slane %v1646, %v1659
        %v1661 = vcombine.high %v1653, %v1653
        %1662 = vrot.lane.b32.xlu0 %v1653, 79
        %v1663 = vpop.permute.xlu0 %1662
        %1664 = vrot.lane.b32.xlu0 %v1661, 79
        %v1665 = vpop.permute.xlu0 %1664
        %1666 = vrot.lane.b32.xlu0 %v1660, 79
        %v1667 = vpop.permute.xlu0 %1666
        %vm1668 = vcmask 646144
        %v1669 = vsel %vm1668, %v1663, %v1665
        %v1670 = vsel %vm1668, %v1665, %v1667
        %v1673 = vmul.f32 %v1644, %v1669
        %v1674 = vmul.f32 %v1644, %v1670
        %v1675 = vadd.f32 %v1637, %v1673
        %v1676 = vadd.f32 %v1638, %v1674
        %v1677 = vsel %vm249, 1, 0
        %v1678 = vsel %vm250, 1, 0
        %vm1679 = vcmp.eq.s32.totalorder %v1677, 1
        %vm1680 = vcmp.eq.s32.totalorder %v1678, 1
        %v1681 = vsel %vm1679, %v1675, 0.0
        %v1682 = vsel %vm1680, %v1676, 0.0
        %v1683 = vadd.f32 %v1409, %v1681
        %v1684 = vadd.f32 %v1410, %v1682
        %v1685 = vld [vmem:[#allocation2] sm:$0x3f]
        %s1686 = sld [smem:[#allocation7 + $0x5]]
        %s1687 = sld [smem:[#allocation7 + $0x36]]
        %v1688 = vstv %s1686
        %v1689 = vstv %s1687
        %v1690 = vsel %vm257, %v1688, %v1689
        %v1692 = vcombine.high %v1685, %v1685
        %v1694 = vunpack.c.l.s4 1983009808
        %v1695 = vunpack.c.0.s8 %v1694
        %v1696 = vlaneseq
        %v1697 = vshrl.u32 %v1696, 7
        %v1698 = vsub.s32 %v1695, %v1697
        %v1699 = vrot.slane %v1685, %v1698
        %v1701 = vunpack.c.l.s4 1983009808
        %v1702 = vunpack.c.0.s8 %v1701
        %v1703 = vlaneseq
        %v1704 = vshrl.u32 %v1703, 7
        %v1705 = vsub.s32 %v1702, %v1704
        %v1706 = vrot.slane %v1692, %v1705
        %v1707 = vcombine.high %v1699, %v1699
        %1708 = vrot.lane.b32.xlu0 %v1699, 46
        %v1709 = vpop.permute.xlu0 %1708
        %1710 = vrot.lane.b32.xlu0 %v1707, 46
        %v1711 = vpop.permute.xlu0 %1710
        %1712 = vrot.lane.b32.xlu0 %v1706, 46
        %v1713 = vpop.permute.xlu0 %1712
        %vm1714 = vcmask 375808
        %v1715 = vsel %vm1714, %v1709, %v1711
        %v1716 = vsel %vm1714, %v1711, %v1713
        %v1719 = vmul.f32 %v1690, %v1715
        %v1720 = vmul.f32 %v1690, %v1716
        %v1721 = vadd.f32 %v1719, 0.0
        %v1722 = vadd.f32 %v1720, 0.0
        %v1723 = vld [vmem:[#allocation2] sm:$0x3f]
        %s1724 = sld [smem:[#allocation7 + $0xc]]
        %s1725 = sld [smem:[#allocation7 + $0x3d]]
        %v1726 = vstv %s1724
        %v1727 = vstv %s1725
        %v1728 = vsel %vm257, %v1726, %v1727
        %v1730 = vcombine.high %v1723, %v1723
        %v1732 = vunpack.c.l.s4 1983009808
        %v1733 = vunpack.c.0.s8 %v1732
        %v1734 = vlaneseq
        %v1735 = vshrl.u32 %v1734, 7
        %v1736 = vsub.s32 %v1733, %v1735
        %v1737 = vrot.slane %v1723, %v1736
        %v1739 = vunpack.c.l.s4 1983009808
        %v1740 = vunpack.c.0.s8 %v1739
        %v1741 = vlaneseq
        %v1742 = vshrl.u32 %v1741, 7
        %v1743 = vsub.s32 %v1740, %v1742
        %v1744 = vrot.slane %v1730, %v1743
        %v1745 = vcombine.high %v1737, %v1737
        %1746 = vrot.lane.b32.xlu0 %v1737, 30
        %v1747 = vpop.permute.xlu0 %1746
        %1748 = vrot.lane.b32.xlu0 %v1745, 30
        %v1749 = vpop.permute.xlu0 %1748
        %1750 = vrot.lane.b32.xlu0 %v1744, 30
        %v1751 = vpop.permute.xlu0 %1750
        %vm1752 = vcmask 244736
        %v1753 = vsel %vm1752, %v1747, %v1749
        %v1754 = vsel %vm1752, %v1749, %v1751
        %v1757 = vmul.f32 %v1728, %v1753
        %v1758 = vmul.f32 %v1728, %v1754
        %v1759 = vadd.f32 %v1721, %v1757
        %v1760 = vadd.f32 %v1722, %v1758
        %v1761 = vld [vmem:[#allocation2] sm:$0x3f]
        %s1762 = sld [smem:[#allocation7 + $0x13]]
        %s1763 = sld [smem:[#allocation7 + $0x44]]
        %v1764 = vstv %s1762
        %v1765 = vstv %s1763
        %v1766 = vsel %vm257, %v1764, %v1765
        %v1768 = vcombine.high %v1761, %v1761
        %v1770 = vunpack.c.l.s4 1983009808
        %v1771 = vunpack.c.0.s8 %v1770
        %v1772 = vlaneseq
        %v1773 = vshrl.u32 %v1772, 7
        %v1774 = vsub.s32 %v1771, %v1773
        %v1775 = vrot.slane %v1761, %v1774
        %v1777 = vunpack.c.l.s4 1983009808
        %v1778 = vunpack.c.0.s8 %v1777
        %v1779 = vlaneseq
        %v1780 = vshrl.u32 %v1779, 7
        %v1781 = vsub.s32 %v1778, %v1780
        %v1782 = vrot.slane %v1768, %v1781
        %v1783 = vcombine.high %v1775, %v1775
        %1784 = vrot.lane.b32.xlu0 %v1775, 14
        %v1785 = vpop.permute.xlu0 %1784
        %1786 = vrot.lane.b32.xlu0 %v1783, 14
        %v1787 = vpop.permute.xlu0 %1786
        %1788 = vrot.lane.b32.xlu0 %v1782, 14
        %v1789 = vpop.permute.xlu0 %1788
        %vm1790 = vcmask 113664
        %v1791 = vsel %vm1790, %v1785, %v1787
        %v1792 = vsel %vm1790, %v1787, %v1789
        %v1795 = vmul.f32 %v1766, %v1791
        %v1796 = vmul.f32 %v1766, %v1792
        %v1797 = vadd.f32 %v1759, %v1795
        %v1798 = vadd.f32 %v1760, %v1796
        %v1799 = vld [vmem:[#allocation2 + $0x2] sm:$0x3f]
        %s1800 = sld [smem:[#allocation7 + $0x1a]]
        %s1801 = sld [smem:[#allocation7 + $0x4b]]
        %v1802 = vstv %s1800
        %v1803 = vstv %s1801
        %v1804 = vsel %vm257, %v1802, %v1803
        %v1806 = vcombine.high %v1799, %v1799
        %v1808 = vunpack.c.l.s4 1983009808
        %v1809 = vunpack.c.0.s8 %v1808
        %v1810 = vlaneseq
        %v1811 = vshrl.u32 %v1810, 7
        %v1812 = vsub.s32 %v1809, %v1811
        %v1813 = vrot.slane %v1799, %v1812
        %v1815 = vunpack.c.l.s4 1983009808
        %v1816 = vunpack.c.0.s8 %v1815
        %v1817 = vlaneseq
        %v1818 = vshrl.u32 %v1817, 7
        %v1819 = vsub.s32 %v1816, %v1818
        %v1820 = vrot.slane %v1806, %v1819
        %v1821 = vcombine.high %v1813, %v1813
        %1822 = vrot.lane.b32.xlu0 %v1813, 126
        %v1823 = vpop.permute.xlu0 %1822
        %1824 = vrot.lane.b32.xlu0 %v1821, 126
        %v1825 = vpop.permute.xlu0 %1824
        %1826 = vrot.lane.b32.xlu0 %v1820, 126
        %v1827 = vpop.permute.xlu0 %1826
        %vm1828 = vcmask 1031168
        %v1829 = vsel %vm1828, %v1823, %v1825
        %v1830 = vsel %vm1828, %v1825, %v1827
        %v1833 = vmul.f32 %v1804, %v1829
        %v1834 = vmul.f32 %v1804, %v1830
        %v1835 = vadd.f32 %v1797, %v1833
        %v1836 = vadd.f32 %v1798, %v1834
        %v1837 = vld [vmem:[#allocation2 + $0x2] sm:$0x3f]
        %s1838 = sld [smem:[#allocation7 + $0x21]]
        %s1839 = sld [smem:[#allocation7 + $0x52]]
        %v1840 = vstv %s1838
        %v1841 = vstv %s1839
        %v1842 = vsel %vm257, %v1840, %v1841
        %v1844 = vcombine.high %v1837, %v1837
        %v1846 = vunpack.c.l.s4 1983009808
        %v1847 = vunpack.c.0.s8 %v1846
        %v1848 = vlaneseq
        %v1849 = vshrl.u32 %v1848, 7
        %v1850 = vsub.s32 %v1847, %v1849
        %v1851 = vrot.slane %v1837, %v1850
        %v1853 = vunpack.c.l.s4 1983009808
        %v1854 = vunpack.c.0.s8 %v1853
        %v1855 = vlaneseq
        %v1856 = vshrl.u32 %v1855, 7
        %v1857 = vsub.s32 %v1854, %v1856
        %v1858 = vrot.slane %v1844, %v1857
        %v1859 = vcombine.high %v1851, %v1851
        %1860 = vrot.lane.b32.xlu0 %v1851, 110
        %v1861 = vpop.permute.xlu0 %1860
        %1862 = vrot.lane.b32.xlu0 %v1859, 110
        %v1863 = vpop.permute.xlu0 %1862
        %1864 = vrot.lane.b32.xlu0 %v1858, 110
        %v1865 = vpop.permute.xlu0 %1864
        %vm1866 = vcmask 900096
        %v1867 = vsel %vm1866, %v1861, %v1863
        %v1868 = vsel %vm1866, %v1863, %v1865
        %v1871 = vmul.f32 %v1842, %v1867
        %v1872 = vmul.f32 %v1842, %v1868
        %v1873 = vadd.f32 %v1835, %v1871
        %v1874 = vadd.f32 %v1836, %v1872
        %v1875 = vld [vmem:[#allocation2 + $0x2] sm:$0x3f]
        %s1876 = sld [smem:[#allocation7 + $0x28]]
        %s1877 = sld [smem:[#allocation7 + $0x59]]
        %v1878 = vstv %s1876
        %v1879 = vstv %s1877
        %v1880 = vsel %vm257, %v1878, %v1879
        %v1882 = vcombine.high %v1875, %v1875
        %v1884 = vunpack.c.l.s4 1983009808
        %v1885 = vunpack.c.0.s8 %v1884
        %v1886 = vlaneseq
        %v1887 = vshrl.u32 %v1886, 7
        %v1888 = vsub.s32 %v1885, %v1887
        %v1889 = vrot.slane %v1875, %v1888
        %v1891 = vunpack.c.l.s4 1983009808
        %v1892 = vunpack.c.0.s8 %v1891
        %v1893 = vlaneseq
        %v1894 = vshrl.u32 %v1893, 7
        %v1895 = vsub.s32 %v1892, %v1894
        %v1896 = vrot.slane %v1882, %v1895
        %v1897 = vcombine.high %v1889, %v1889
        %1898 = vrot.lane.b32.xlu0 %v1889, 94
        %v1899 = vpop.permute.xlu0 %1898
        %1900 = vrot.lane.b32.xlu0 %v1897, 94
        %v1901 = vpop.permute.xlu0 %1900
        %1902 = vrot.lane.b32.xlu0 %v1896, 94
        %v1903 = vpop.permute.xlu0 %1902
        %vm1904 = vcmask 769024
        %v1905 = vsel %vm1904, %v1899, %v1901
        %v1906 = vsel %vm1904, %v1901, %v1903
        %v1909 = vmul.f32 %v1880, %v1905
        %v1910 = vmul.f32 %v1880, %v1906
        %v1911 = vadd.f32 %v1873, %v1909
        %v1912 = vadd.f32 %v1874, %v1910
        %v1913 = vld [vmem:[#allocation2 + $0x2] sm:$0x3f]
        %s1914 = sld [smem:[#allocation7 + $0x2f]]
        %s1915 = sld [smem:[#allocation7 + $0x60]]
        %v1916 = vstv %s1914
        %v1917 = vstv %s1915
        %v1918 = vsel %vm257, %v1916, %v1917
        %v1920 = vcombine.high %v1913, %v1913
        %v1922 = vunpack.c.l.s4 1983009808
        %v1923 = vunpack.c.0.s8 %v1922
        %v1924 = vlaneseq
        %v1925 = vshrl.u32 %v1924, 7
        %v1926 = vsub.s32 %v1923, %v1925
        %v1927 = vrot.slane %v1913, %v1926
        %v1929 = vunpack.c.l.s4 1983009808
        %v1930 = vunpack.c.0.s8 %v1929
        %v1931 = vlaneseq
        %v1932 = vshrl.u32 %v1931, 7
        %v1933 = vsub.s32 %v1930, %v1932
        %v1934 = vrot.slane %v1920, %v1933
        %v1935 = vcombine.high %v1927, %v1927
        %1936 = vrot.lane.b32.xlu0 %v1927, 78
        %v1937 = vpop.permute.xlu0 %1936
        %1938 = vrot.lane.b32.xlu0 %v1935, 78
        %v1939 = vpop.permute.xlu0 %1938
        %1940 = vrot.lane.b32.xlu0 %v1934, 78
        %v1941 = vpop.permute.xlu0 %1940
        %vm1942 = vcmask 637952
        %v1943 = vsel %vm1942, %v1937, %v1939
        %v1944 = vsel %vm1942, %v1939, %v1941
        %v1947 = vmul.f32 %v1918, %v1943
        %v1948 = vmul.f32 %v1918, %v1944
        %v1949 = vadd.f32 %v1911, %v1947
        %v1950 = vadd.f32 %v1912, %v1948
        %v1951 = vsel %vm251, 1, 0
        %v1952 = vsel %vm252, 1, 0
        %vm1953 = vcmp.eq.s32.totalorder %v1951, 1
        %vm1954 = vcmp.eq.s32.totalorder %v1952, 1
        %v1955 = vsel %vm1953, %v1949, 0.0
        %v1956 = vsel %vm1954, %v1950, 0.0
        %v1957 = vadd.f32 %v1683, %v1955
        %v1958 = vadd.f32 %v1684, %v1956
        %v1959 = vld [vmem:[#allocation2] sm:$0x3f]
        %s1960 = sld [smem:[#allocation7 + $0x6]]
        %s1961 = sld [smem:[#allocation7 + $0x37]]
        %v1962 = vstv %s1960
        %v1963 = vstv %s1961
        %v1964 = vsel %vm257, %v1962, %v1963
        %v1966 = vcombine.high %v1959, %v1959
        %v1968 = vunpack.c.l.s4 1983009808
        %v1969 = vunpack.c.0.s8 %v1968
        %v1970 = vlaneseq
        %v1971 = vshrl.u32 %v1970, 7
        %v1972 = vsub.s32 %v1969, %v1971
        %v1973 = vrot.slane %v1959, %v1972
        %v1975 = vunpack.c.l.s4 1983009808
        %v1976 = vunpack.c.0.s8 %v1975
        %v1977 = vlaneseq
        %v1978 = vshrl.u32 %v1977, 7
        %v1979 = vsub.s32 %v1976, %v1978
        %v1980 = vrot.slane %v1966, %v1979
        %v1981 = vcombine.high %v1973, %v1973
        %1982 = vrot.lane.b32.xlu0 %v1973, 45
        %v1983 = vpop.permute.xlu0 %1982
        %1984 = vrot.lane.b32.xlu0 %v1981, 45
        %v1985 = vpop.permute.xlu0 %1984
        %1986 = vrot.lane.b32.xlu0 %v1980, 45
        %v1987 = vpop.permute.xlu0 %1986
        %vm1988 = vcmask 367616
        %v1989 = vsel %vm1988, %v1983, %v1985
        %v1990 = vsel %vm1988, %v1985, %v1987
        %v1993 = vmul.f32 %v1964, %v1989
        %v1994 = vmul.f32 %v1964, %v1990
        %v1995 = vadd.f32 %v1993, 0.0
        %v1996 = vadd.f32 %v1994, 0.0
        %v1997 = vld [vmem:[#allocation2] sm:$0x3f]
        %s1998 = sld [smem:[#allocation7 + $0xd]]
        %s1999 = sld [smem:[#allocation7 + $0x3e]]
        %v2000 = vstv %s1998
        %v2001 = vstv %s1999
        %v2002 = vsel %vm257, %v2000, %v2001
        %v2004 = vcombine.high %v1997, %v1997
        %v2006 = vunpack.c.l.s4 1983009808
        %v2007 = vunpack.c.0.s8 %v2006
        %v2008 = vlaneseq
        %v2009 = vshrl.u32 %v2008, 7
        %v2010 = vsub.s32 %v2007, %v2009
        %v2011 = vrot.slane %v1997, %v2010
        %v2013 = vunpack.c.l.s4 1983009808
        %v2014 = vunpack.c.0.s8 %v2013
        %v2015 = vlaneseq
        %v2016 = vshrl.u32 %v2015, 7
        %v2017 = vsub.s32 %v2014, %v2016
        %v2018 = vrot.slane %v2004, %v2017
        %v2019 = vcombine.high %v2011, %v2011
        %2020 = vrot.lane.b32.xlu0 %v2011, 29
        %v2021 = vpop.permute.xlu0 %2020
        %2022 = vrot.lane.b32.xlu0 %v2019, 29
        %v2023 = vpop.permute.xlu0 %2022
        %2024 = vrot.lane.b32.xlu0 %v2018, 29
        %v2025 = vpop.permute.xlu0 %2024
        %vm2026 = vcmask 236544
        %v2027 = vsel %vm2026, %v2021, %v2023
        %v2028 = vsel %vm2026, %v2023, %v2025
        %v2031 = vmul.f32 %v2002, %v2027
        %v2032 = vmul.f32 %v2002, %v2028
        %v2033 = vadd.f32 %v1995, %v2031
        %v2034 = vadd.f32 %v1996, %v2032
        %v2035 = vld [vmem:[#allocation2] sm:$0x3f]
        %s2036 = sld [smem:[#allocation7 + $0x14]]
        %s2037 = sld [smem:[#allocation7 + $0x45]]
        %v2038 = vstv %s2036
        %v2039 = vstv %s2037
        %v2040 = vsel %vm257, %v2038, %v2039
        %v2042 = vcombine.high %v2035, %v2035
        %v2044 = vunpack.c.l.s4 1983009808
        %v2045 = vunpack.c.0.s8 %v2044
        %v2046 = vlaneseq
        %v2047 = vshrl.u32 %v2046, 7
        %v2048 = vsub.s32 %v2045, %v2047
        %v2049 = vrot.slane %v2035, %v2048
        %v2051 = vunpack.c.l.s4 1983009808
        %v2052 = vunpack.c.0.s8 %v2051
        %v2053 = vlaneseq
        %v2054 = vshrl.u32 %v2053, 7
        %v2055 = vsub.s32 %v2052, %v2054
        %v2056 = vrot.slane %v2042, %v2055
        %v2057 = vcombine.high %v2049, %v2049
        %2058 = vrot.lane.b32.xlu0 %v2049, 13
        %v2059 = vpop.permute.xlu0 %2058
        %2060 = vrot.lane.b32.xlu0 %v2057, 13
        %v2061 = vpop.permute.xlu0 %2060
        %2062 = vrot.lane.b32.xlu0 %v2056, 13
        %v2063 = vpop.permute.xlu0 %2062
        %vm2064 = vcmask 105472
        %v2065 = vsel %vm2064, %v2059, %v2061
        %v2066 = vsel %vm2064, %v2061, %v2063
        %v2069 = vmul.f32 %v2040, %v2065
        %v2070 = vmul.f32 %v2040, %v2066
        %v2071 = vadd.f32 %v2033, %v2069
        %v2072 = vadd.f32 %v2034, %v2070
        %v2073 = vld [vmem:[#allocation2 + $0x2] sm:$0x3f]
        %s2074 = sld [smem:[#allocation7 + $0x1b]]
        %s2075 = sld [smem:[#allocation7 + $0x4c]]
        %v2076 = vstv %s2074
        %v2077 = vstv %s2075
        %v2078 = vsel %vm257, %v2076, %v2077
        %v2080 = vcombine.high %v2073, %v2073
        %v2082 = vunpack.c.l.s4 1983009808
        %v2083 = vunpack.c.0.s8 %v2082
        %v2084 = vlaneseq
        %v2085 = vshrl.u32 %v2084, 7
        %v2086 = vsub.s32 %v2083, %v2085
        %v2087 = vrot.slane %v2073, %v2086
        %v2089 = vunpack.c.l.s4 1983009808
        %v2090 = vunpack.c.0.s8 %v2089
        %v2091 = vlaneseq
        %v2092 = vshrl.u32 %v2091, 7
        %v2093 = vsub.s32 %v2090, %v2092
        %v2094 = vrot.slane %v2080, %v2093
        %v2095 = vcombine.high %v2087, %v2087
        %2096 = vrot.lane.b32.xlu0 %v2087, 125
        %v2097 = vpop.permute.xlu0 %2096
        %2098 = vrot.lane.b32.xlu0 %v2095, 125
        %v2099 = vpop.permute.xlu0 %2098
        %2100 = vrot.lane.b32.xlu0 %v2094, 125
        %v2101 = vpop.permute.xlu0 %2100
        %vm2102 = vcmask 1022976
        %v2103 = vsel %vm2102, %v2097, %v2099
        %v2104 = vsel %vm2102, %v2099, %v2101
        %v2107 = vmul.f32 %v2078, %v2103
        %v2108 = vmul.f32 %v2078, %v2104
        %v2109 = vadd.f32 %v2071, %v2107
        %v2110 = vadd.f32 %v2072, %v2108
        %v2111 = vld [vmem:[#allocation2 + $0x2] sm:$0x3f]
        %s2112 = sld [smem:[#allocation7 + $0x22]]
        %s2113 = sld [smem:[#allocation7 + $0x53]]
        %v2114 = vstv %s2112
        %v2115 = vstv %s2113
        %v2116 = vsel %vm257, %v2114, %v2115
        %v2118 = vcombine.high %v2111, %v2111
        %v2120 = vunpack.c.l.s4 1983009808
        %v2121 = vunpack.c.0.s8 %v2120
        %v2122 = vlaneseq
        %v2123 = vshrl.u32 %v2122, 7
        %v2124 = vsub.s32 %v2121, %v2123
        %v2125 = vrot.slane %v2111, %v2124
        %v2127 = vunpack.c.l.s4 1983009808
        %v2128 = vunpack.c.0.s8 %v2127
        %v2129 = vlaneseq
        %v2130 = vshrl.u32 %v2129, 7
        %v2131 = vsub.s32 %v2128, %v2130
        %v2132 = vrot.slane %v2118, %v2131
        %v2133 = vcombine.high %v2125, %v2125
        %2134 = vrot.lane.b32.xlu0 %v2125, 109
        %v2135 = vpop.permute.xlu0 %2134
        %2136 = vrot.lane.b32.xlu0 %v2133, 109
        %v2137 = vpop.permute.xlu0 %2136
        %2138 = vrot.lane.b32.xlu0 %v2132, 109
        %v2139 = vpop.permute.xlu0 %2138
        %vm2140 = vcmask 891904
        %v2141 = vsel %vm2140, %v2135, %v2137
        %v2142 = vsel %vm2140, %v2137, %v2139
        %v2145 = vmul.f32 %v2116, %v2141
        %v2146 = vmul.f32 %v2116, %v2142
        %v2147 = vadd.f32 %v2109, %v2145
        %v2148 = vadd.f32 %v2110, %v2146
        %v2149 = vld [vmem:[#allocation2 + $0x2] sm:$0x3f]
        %s2150 = sld [smem:[#allocation7 + $0x29]]
        %s2151 = sld [smem:[#allocation7 + $0x5a]]
        %v2152 = vstv %s2150
        %v2153 = vstv %s2151
        %v2154 = vsel %vm257, %v2152, %v2153
        %v2156 = vcombine.high %v2149, %v2149
        %v2158 = vunpack.c.l.s4 1983009808
        %v2159 = vunpack.c.0.s8 %v2158
        %v2160 = vlaneseq
        %v2161 = vshrl.u32 %v2160, 7
        %v2162 = vsub.s32 %v2159, %v2161
        %v2163 = vrot.slane %v2149, %v2162
        %v2165 = vunpack.c.l.s4 1983009808
        %v2166 = vunpack.c.0.s8 %v2165
        %v2167 = vlaneseq
        %v2168 = vshrl.u32 %v2167, 7
        %v2169 = vsub.s32 %v2166, %v2168
        %v2170 = vrot.slane %v2156, %v2169
        %v2171 = vcombine.high %v2163, %v2163
        %2172 = vrot.lane.b32.xlu0 %v2163, 93
        %v2173 = vpop.permute.xlu0 %2172
        %2174 = vrot.lane.b32.xlu0 %v2171, 93
        %v2175 = vpop.permute.xlu0 %2174
        %2176 = vrot.lane.b32.xlu0 %v2170, 93
        %v2177 = vpop.permute.xlu0 %2176
        %vm2178 = vcmask 760832
        %v2179 = vsel %vm2178, %v2173, %v2175
        %v2180 = vsel %vm2178, %v2175, %v2177
        %v2183 = vmul.f32 %v2154, %v2179
        %v2184 = vmul.f32 %v2154, %v2180
        %v2185 = vadd.f32 %v2147, %v2183
        %v2186 = vadd.f32 %v2148, %v2184
        %v2187 = vld [vmem:[#allocation2 + $0x2] sm:$0x3f]
        %s2188 = sld [smem:[#allocation7 + $0x30]]
        %s2189 = sld [smem:[#allocation7 + $0x61]]
        %v2190 = vstv %s2188
        %v2191 = vstv %s2189
        %v2192 = vsel %vm257, %v2190, %v2191
        %v2194 = vcombine.high %v2187, %v2187
        %v2196 = vunpack.c.l.s4 1983009808
        %v2197 = vunpack.c.0.s8 %v2196
        %v2198 = vlaneseq
        %v2199 = vshrl.u32 %v2198, 7
        %v2200 = vsub.s32 %v2197, %v2199
        %v2201 = vrot.slane %v2187, %v2200
        %v2203 = vunpack.c.l.s4 1983009808
        %v2204 = vunpack.c.0.s8 %v2203
        %v2205 = vlaneseq
        %v2206 = vshrl.u32 %v2205, 7
        %v2207 = vsub.s32 %v2204, %v2206
        %v2208 = vrot.slane %v2194, %v2207
        %v2209 = vcombine.high %v2201, %v2201
        %2210 = vrot.lane.b32.xlu0 %v2201, 77
        %v2211 = vpop.permute.xlu0 %2210
        %2212 = vrot.lane.b32.xlu0 %v2209, 77
        %v2213 = vpop.permute.xlu0 %2212
        %2214 = vrot.lane.b32.xlu0 %v2208, 77
        %v2215 = vpop.permute.xlu0 %2214
        %vm2216 = vcmask 629760
        %v2217 = vsel %vm2216, %v2211, %v2213
        %v2218 = vsel %vm2216, %v2213, %v2215
        %v2221 = vmul.f32 %v2192, %v2217
        %v2222 = vmul.f32 %v2192, %v2218
        %v2223 = vadd.f32 %v2185, %v2221
        %v2224 = vadd.f32 %v2186, %v2222
        %v2225 = vsel %vm253, 1, 0
        %v2226 = vsel %vm254, 1, 0
        %vm2227 = vcmp.eq.s32.totalorder %v2225, 1
        %vm2228 = vcmp.eq.s32.totalorder %v2226, 1
        %v2229 = vsel %vm2227, %v2223, 0.0
        %v2230 = vsel %vm2228, %v2224, 0.0
        %v2231 = vadd.f32 %v1957, %v2229
        %v2232 = vadd.f32 %v1958, %v2230
        %vm2233 = vcmask 1041408
        %v2234 = vsel %vm2233, %v2231, 0.0
        %v2235 = vrot.slane %v2234, 4
        %v2236 = vadd.f32 %v2234, %v2235
        %v2237 = vrot.slane %v2236, 2
        %v2238 = vadd.f32 %v2236, %v2237
        %v2239 = vrot.slane %v2238, 1
        %v2240 = vadd.f32 %v2238, %v2239
        %v2241 = vsel %vm2233, %v2232, 0.0
        %v2242 = vrot.slane %v2241, 4
        %v2243 = vadd.f32 %v2241, %v2242
        %v2244 = vrot.slane %v2243, 2
        %v2245 = vadd.f32 %v2243, %v2244
        %v2246 = vrot.slane %v2245, 1
        %v2247 = vadd.f32 %v2245, %v2246
        %v2248 = vstv %s214
        %v2249 = vmul.f32 %v2240, %v2248
        %v2250 = vmul.f32 %v2247, %v2248
        %v2251 = vstv %s215
        %v2252 = vadd.f32 %v2249, %v2251
        %v2253 = vadd.f32 %v2250, %v2251
        %v2254 = vxor.u32 %v2252, 2147483648
        %v2255 = vxor.u32 %v2253, 2147483648
        %v2256 = vmul.f32 %v2254, 1.442695
        %v2257 = vpow.pop %v2256
        %v2258 = vmul.f32 %v2255, 1.442695
        %v2259 = vpow.pop %v2258
        %v2260 = vadd.f32 %v2257, 1.0
        %v2261 = vadd.f32 %v2259, 1.0
        %v2262 = vrcp.pop %v2260
        %v2263 = vmul.f32 1.0, %v2262
        %v2264 = vrcp.pop %v2261
        %v2265 = vmul.f32 1.0, %v2264
        %v2266 = vld [vmem:[%s182] sm:$0xff]
        %v2269 = vcombine.low %v2263, %v2265
        %v2271 = vmul.f32 %v2266, %v2269
        %2272 = vst [vmem:[%s213] sm:$0xff] %v2271
        %s2273 = sand.u32 %s98, 1
        %s2274 = scalar_lea.sflag [#allocation5], %s2273
        %s2275 = sand.u32 %s98, 1
        %s2276 = smul.addr %s2275, 8
        %s2277 = scalar_lea.vmem [#allocation10], %s2276
        // Predicated region
        $region45: #{tpu_custom_call.1} parent=31 // pred_check
          %p2278 = pneg %p108
        $region46: #{tpu_custom_call.1} parent=31 // pred_check_branch
          %2280 = sbr.rel (%p2278) target = $region48
        $region47: #{tpu_custom_call.1} parent=31 // pred_region
          %s2282 = ssub.s32 128, 128
          %2283 = vsyncadd %s2274, %s2282
          %s2284 = smul.addr %s22, 2
          %s2285 = smul.addr %s2284, 64
          %s2286 = scalar_lea.hbm %s3, %s2285
          %s2288 = sshll.u32 %s2277, 4
          %s2289 = int_to_ptr.vmem [resolvable:$true] %s2288
          %2291 = dma.vmem_to_hbm [thread:$0]  %s2289, 128, %s2286, %s2274
        $region48: #{tpu_custom_call.1} parent=31 // pred_fallthru
          _
      $region32: #{tpu_custom_call.1} parent=5 // pred_fallthru
        _
      %p2292 = scmp.le.s32.totalorder 2, %s17
      // Predicated region
      $region49: #{tpu_custom_call.1} parent=5 // pred_check
        %p2293 = pneg %p2292
      $region50: #{tpu_custom_call.1} parent=5 // pred_check_branch
        %2295 = sbr.rel (%p2293) target = $region52
      $region51: #{tpu_custom_call.1} parent=5 // pred_region
        %s2296 = ssub.s32 %s17, 2
        // Predicated region
        $region53: #{tpu_custom_call.1} parent=51 // pred_check
          %p2297 = pneg %p114
        $region54: #{tpu_custom_call.1} parent=51 // pred_check_branch
          %2299 = sbr.rel (%p2297) target = $region56
        $region55: #{tpu_custom_call.1} parent=51 // pred_region
          %s2300 = sand.u32 %s99, 1
          %s2301 = scalar_lea.sflag [#allocation5], %s2300
          %s2302 = sand.u32 %s99, 1
          %s2303 = smul.addr %s2302, 8
          %s2304 = scalar_lea.vmem [#allocation10], %s2303
          %2305 = dma.done %s2301, 128
        $region56: #{tpu_custom_call.1} parent=51 // pred_fallthru
          _
      $region52: #{tpu_custom_call.1} parent=5 // pred_fallthru
        _
    $region6: #{tpu_custom_call.1} parent=1 // loop_footer
      %s21 = sadd.s32 1, %s17
    $region7: #{tpu_custom_call.1} parent=1 // loop_footer_branch
      %16 = sbr.rel target = $region3
    $region8: #{tpu_custom_call.1} parent=1 // loop_exit
      _
    %2306 = vsyncpa [#allocation4], 1
    %s2307 = scalar_lea.sflag [#allocation4], 1
    %2308 = vsyncpa %s2307, 1
    %2309 = vsyncpa [#allocation5], 1
    %s2310 = scalar_lea.sflag [#allocation5], 1
    %2311 = vsyncpa %s2310, 1
    %2312 = vsyncpa [#allocation6], 1
    %s2313 = scalar_lea.sflag [#allocation6], 1
    %2314 = vsyncpa %s2313, 1
    %2315 = vsyncpa [#allocation9], 1

</llo_original>
